<compile_context>
chip_gen: v6e
topology: v6e:2x2x1
jax: 0.10.0
libtpu: 0.0.40
codegen_flags: <defaults>
</compile_context>

<pallas_src>
import functools
import math

import jax
import jax.numpy as jnp
from jax import lax
from jax.experimental import pallas as pl
from jax.experimental.pallas import tpu as pltpu


# ---------------------------------------------------------------------------
# In-kernel helpers (all f32 elementwise math)
# ---------------------------------------------------------------------------
def _layer_norm(x, w, b, eps=1e-12):
    mean = jnp.mean(x, axis=-1, keepdims=True)
    var = jnp.mean((x - mean) ** 2, axis=-1, keepdims=True)
    return w * ((x - mean) * lax.rsqrt(var + eps)) + b


def _gelu(x):  # 高斯误差线性单元 (erf-based GELU, exactly as in the PyTorch source)
    return x * 0.5 * (1.0 + lax.erf(x / math.sqrt(2.0)))


# ---------------------------------------------------------------------------
# Kernel: one grid step = one full encoder sub-layer applied to the whole
# batch, on the VMEM-resident hidden state.
# ---------------------------------------------------------------------------
def encoder_kernel(x_ref, mask_ref,
                   wqkv_ref, bqkv_ref, wao_ref, bao_ref, ln1w_ref, ln1b_ref,
                   wi_ref, bi_ref, wo_ref, bo_ref, ln2w_ref, ln2b_ref,
                   out_ref, h_ref, *, num_heads, head_dim, write_all_layers):
    layer = pl.program_id(0)

    # Load the input into the resident hidden scratch on the first layer only.
    @pl.when(layer == 0)
    def _():
        h_ref[...] = x_ref[...].astype(jnp.float32)

    h = h_ref[...]                               # (B, S, H) f32, layer-resident
    B, S, H = h.shape
    nh, hd = num_heads, head_dim
    x2 = h.reshape(B * S, H)                     # residual input, f32
    x_bf = x2.astype(jnp.bfloat16)

    # --- 自注意力层: fused Q/K/V projection — one lane-dense MXU matmul -----
    qkv = jnp.dot(x_bf, wqkv_ref[0],
                  preferred_element_type=jnp.float32) + bqkv_ref[0]   # (B*S, 3H)

    def split_heads(t2):                         # (B*S, H) -> (B*nh, S, hd)
        t3 = t2.reshape(B, S, H)
        parts = [t3[:, :, i * hd:(i + 1) * hd] for i in range(nh)]
        return jnp.stack(parts, axis=1).reshape(B * nh, S, hd)

    q = split_heads(qkv[:, 0 * H:1 * H]).astype(jnp.bfloat16)
    k = split_heads(qkv[:, 1 * H:2 * H]).astype(jnp.bfloat16)
    v = split_heads(qkv[:, 2 * H:3 * H]).astype(jnp.bfloat16)

    scale = 1.0 / math.sqrt(hd)
    scores = jnp.einsum('gqd,gkd->gqk', q, k,
                        preferred_element_type=jnp.float32) * scale   # (B*nh,S,S)
    scores = scores.reshape(B, nh, S, S) + mask_ref[...].reshape(B, 1, 1, S)
    scores = scores - jnp.max(scores, axis=-1, keepdims=True)
    e = jnp.exp(scores)
    probs = e * pl.reciprocal(jnp.sum(e, axis=-1, keepdims=True), approx=True)

    ctx = jnp.einsum('gqk,gkd->gqd',
                     probs.reshape(B * nh, S, S).astype(jnp.bfloat16), v,
                     preferred_element_type=jnp.float32)              # (B*nh,S,hd)
    ctx4 = ctx.reshape(B, nh, S, hd)
    ctx2 = jnp.concatenate([ctx4[:, i] for i in range(nh)],
                           axis=-1).reshape(B * S, H)                 # merge heads

    # --- 自注意力输出层: single (H,H) projection + add & norm ---------------
    attn = jnp.dot(ctx2.astype(jnp.bfloat16), wao_ref[0],
                   preferred_element_type=jnp.float32) + bao_ref[0]
    h1 = _layer_norm(attn + x2, ln1w_ref[0], ln1b_ref[0])

    # --- 中间层: dense + GELU -----------------------------------------------
    inter = jnp.dot(h1.astype(jnp.bfloat16), wi_ref[0],
                    preferred_element_type=jnp.float32) + bi_ref[0]
    inter = _gelu(inter)

    # --- 输出层: dense + residual + layernorm --------------------------------
    out = jnp.dot(inter.astype(jnp.bfloat16), wo_ref[0],
                  preferred_element_type=jnp.float32) + bo_ref[0]
    out = _layer_norm(out + h1, ln2w_ref[0], ln2b_ref[0])

    out3 = out.reshape(B, S, H)
    h_ref[...] = out3                            # carry to next layer

    if write_all_layers:
        out_ref[0] = out3.astype(out_ref.dtype)
    else:
        @pl.when(layer == pl.num_programs(0) - 1)
        def _():
            out_ref[0] = out3.astype(out_ref.dtype)


# ---------------------------------------------------------------------------
# Wrapper: parameter packing + single pallas_call over the layer axis
# ---------------------------------------------------------------------------
_WEIGHT_ORDER = ("wqkv", "bqkv", "wao", "bao", "ln1w", "ln1b",
                 "wi", "bi", "wo", "bo", "ln2w", "ln2b")


def pack_layer_params(layer_params):
    """Stack per-layer params on a leading layer axis; fuse Q/K/V weights."""
    L = len(layer_params)
    H = layer_params[0]["wq"].shape[0]
    I = layer_params[0]["wi"].shape[1]

    def stack(name):
        return jnp.stack([p[name] for p in layer_params], axis=0)

    wqkv = jnp.concatenate([stack("wq"), stack("wk"), stack("wv")], axis=-1)
    bqkv = jnp.concatenate([stack("bq"), stack("bk"), stack("bv")], axis=-1)
    return {
        "wqkv": wqkv.astype(jnp.bfloat16),               # (L, H, 3H)
        "bqkv": bqkv.reshape(L, 1, 3 * H),
        "wao": stack("wao").astype(jnp.bfloat16),        # (L, H, H)
        "bao": stack("bao").reshape(L, 1, H),
        "ln1w": stack("ln1w").reshape(L, 1, H),
        "ln1b": stack("ln1b").reshape(L, 1, H),
        "wi": stack("wi").astype(jnp.bfloat16),          # (L, H, I)
        "bi": stack("bi").reshape(L, 1, I),
        "wo": stack("wo").astype(jnp.bfloat16),          # (L, I, H)
        "bo": stack("bo").reshape(L, 1, H),
        "ln2w": stack("ln2w").reshape(L, 1, H),
        "ln2b": stack("ln2b").reshape(L, 1, H),
    }


def _per_layer_spec(arr):
    blk = (1,) + arr.shape[1:]
    nrest = arr.ndim - 1
    return pl.BlockSpec(blk, lambda l, _n=nrest: (l,) + (0,) * _n)


def _vmem_limit_bytes(B, S, H, I, nh, num_layers, weights):
    per_layer_w = sum(int(w.size) * w.dtype.itemsize // num_layers
                      for w in weights)
    act_bytes = 4 * (3 * B * S * H          # input, resident hidden, residual
                     + 3 * B * S * H        # fused QKV (f32)
                     + 2 * B * nh * S * S   # scores + probs
                     + 2 * B * S * I)       # intermediate + GELU
    limit = 2 * per_layer_w + act_bytes + (8 << 20)   # 2x = double-buffered weights
    # Clamp to [32 MiB, 64 MiB] so the launch stays legal on v7x (64 MiB VMEM);
    # beyond that, tile the FFN / KV axes instead of raising the limit.
    return int(min(max(limit, 32 << 20), 64 << 20))


def encoder_forward(x, mask, packed, *, num_heads, num_layers,
                    output_all_encoded_layers=True):
    """Mirrors 编码器.forward: returns a list of hidden states."""
    B, S, H = x.shape
    head_dim = H // num_heads
    I = packed["wi"].shape[-1]
    weights = [packed[k] for k in _WEIGHT_ORDER]

    kernel = functools.partial(encoder_kernel,
                               num_heads=num_heads, head_dim=head_dim,
                               write_all_layers=output_all_encoded_layers)

    n_out_layers = num_layers if output_all_encoded_layers else 1
    if output_all_encoded_layers:
        out_index_map = lambda l: (l, 0, 0, 0)
    else:
        out_index_map = lambda l: (0, 0, 0, 0)

    out = pl.pallas_call(
        kernel,
        out_shape=jax.ShapeDtypeStruct((n_out_layers, B, S, H), x.dtype),
        grid_spec=pltpu.PrefetchScalarGridSpec(
            num_scalar_prefetch=0,
            grid=(num_layers,),
            in_specs=[pl.BlockSpec((B, S, H), lambda l: (0, 0, 0)),   # x
                      pl.BlockSpec((B, 1, S), lambda l: (0, 0, 0))]   # mask
                     + [_per_layer_spec(w) for w in weights],
            out_specs=pl.BlockSpec((1, B, S, H), out_index_map),
            scratch_shapes=[pltpu.VMEM((B, S, H), jnp.float32)],      # resident hidden
        ),
        compiler_params=pltpu.CompilerParams(
            dimension_semantics=("arbitrary",),
            vmem_limit_bytes=_vmem_limit_bytes(B, S, H, I, num_heads,
                                               num_layers, weights)),
    )(x, mask, *weights)

    return [out[i] for i in range(n_out_layers)]


# ---------------------------------------------------------------------------
# Deterministic parameter construction (synthetic, no checkpoint load)
# ---------------------------------------------------------------------------
def init_layer_params(key, hidden, intermediate):
    ks = jax.random.split(key, 6)
    std = 0.02

    def lin(k, fan_in, fan_out):
        return jax.random.normal(k, (fan_in, fan_out), jnp.float32) * std

    return {
        "wq": lin(ks[0], hidden, hidden), "bq": jnp.zeros((hidden,), jnp.float32),
        "wk": lin(ks[1], hidden, hidden), "bk": jnp.zeros((hidden,), jnp.float32),
        "wv": lin(ks[2], hidden, hidden), "bv": jnp.zeros((hidden,), jnp.float32),
        "wao": lin(ks[3], hidden, hidden), "bao": jnp.zeros((hidden,), jnp.float32),
        "ln1w": jnp.ones((hidden,), jnp.float32),
        "ln1b": jnp.zeros((hidden,), jnp.float32),
        "wi": lin(ks[4], hidden, intermediate),
        "bi": jnp.zeros((intermediate,), jnp.float32),
        "wo": lin(ks[5], intermediate, hidden),
        "bo": jnp.zeros((hidden,), jnp.float32),
        "ln2w": jnp.ones((hidden,), jnp.float32),
        "ln2b": jnp.zeros((hidden,), jnp.float32),
    }


if __name__ == "__main__":
    # 配置: 隐藏层大小=32, 中间层大小=64, 多头注意力层数=4, 隐藏层个数=2,
    #       隐藏层的动作='高斯误差线性单元', 失活率=0 (inference)
    B, S, H, NUM_HEADS, INTER, NUM_LAYERS = 2, 8, 32, 4, 64, 2

    key = jax.random.PRNGKey(0)
    k_x, *k_layers = jax.random.split(key, NUM_LAYERS + 1)

    x = jax.random.normal(k_x, (B, S, H), jnp.float32)

    # additive attention mask [B, 1, S]: 0 for valid tokens, -10000 for padding
    lengths = jnp.array([S, S - 2])
    pos = jnp.arange(S)[None, :]
    mask = jnp.where(pos < lengths[:, None], 0.0, -10000.0).astype(jnp.float32)
    mask = mask[:, None, :]                                # (B, 1, S)

    layer_params = [init_layer_params(k, H, INTER) for k in k_layers]
    packed = pack_layer_params(layer_params)

    # Default path: all encoded layers returned (mirrors the PyTorch default).
    outputs = encoder_forward(x, mask, packed, num_heads=NUM_HEADS,
                              num_layers=NUM_LAYERS,
                              output_all_encoded_layers=True)
    for o in outputs:
        jax.block_until_ready(o)
    assert len(outputs) == NUM_LAYERS
    assert outputs[-1].shape == (B, S, H)

    # Last-layer-only path: the HBM store is gated on the final layer.
    last_only = encoder_forward(x, mask, packed, num_heads=NUM_HEADS,
                                num_layers=NUM_LAYERS,
                                output_all_encoded_layers=False)
    jax.block_until_ready(last_only[-1])
    assert len(last_only) == 1
    assert jnp.allclose(last_only[-1], outputs[-1], atol=1e-5, rtol=1e-5)

    print("KERNEL_OK")
</pallas_src>

<mosaic_0001>
module attributes {stable_mosaic.version = 11 : i64} {
  func.func @encoder_kernel(%arg0: i32, %arg1: memref<2x8x32xf32, #tpu.memory_space<vmem>>, %arg2: memref<2x1x8xf32, #tpu.memory_space<vmem>>, %arg3: memref<1x32x96xbf16, #tpu.memory_space<vmem>>, %arg4: memref<1x1x96xf32, #tpu.memory_space<vmem>>, %arg5: memref<1x32x32xbf16, #tpu.memory_space<vmem>>, %arg6: memref<1x1x32xf32, #tpu.memory_space<vmem>>, %arg7: memref<1x1x32xf32, #tpu.memory_space<vmem>>, %arg8: memref<1x1x32xf32, #tpu.memory_space<vmem>>, %arg9: memref<1x32x64xbf16, #tpu.memory_space<vmem>>, %arg10: memref<1x1x64xf32, #tpu.memory_space<vmem>>, %arg11: memref<1x64x32xbf16, #tpu.memory_space<vmem>>, %arg12: memref<1x1x32xf32, #tpu.memory_space<vmem>>, %arg13: memref<1x1x32xf32, #tpu.memory_space<vmem>>, %arg14: memref<1x1x32xf32, #tpu.memory_space<vmem>>, %arg15: memref<1x2x8x32xf32, #tpu.memory_space<vmem>>, %arg16: memref<2x8x32xf32, #tpu.memory_space<vmem>>) attributes {dimension_semantics = [#tpu.dimension_semantics<arbitrary>], iteration_bounds = array<i64: 2>, scalar_prefetch = 0 : i64, scratch_operands = 1 : i64, tpu.core_type = #tpu.core_type<tc>, window_params = [{pipeline_mode = #tpu.pipeline_mode<synchronous>, transform_indices = @transform_0, window_bounds = array<i64: 2, 8, 32>}, {pipeline_mode = #tpu.pipeline_mode<synchronous>, transform_indices = @transform_1, window_bounds = array<i64: 2, 1, 8>}, {transform_indices = @transform_2, window_bounds = array<i64: 1, 32, 96>}, {transform_indices = @transform_3, window_bounds = array<i64: 1, 1, 96>}, {transform_indices = @transform_4, window_bounds = array<i64: 1, 32, 32>}, {transform_indices = @transform_5, window_bounds = array<i64: 1, 1, 32>}, {transform_indices = @transform_6, window_bounds = array<i64: 1, 1, 32>}, {transform_indices = @transform_7, window_bounds = array<i64: 1, 1, 32>}, {transform_indices = @transform_8, window_bounds = array<i64: 1, 32, 64>}, {transform_indices = @transform_9, window_bounds = array<i64: 1, 1, 64>}, {transform_indices = @transform_10, window_bounds = array<i64: 1, 64, 32>}, {transform_indices = @transform_11, window_bounds = array<i64: 1, 1, 32>}, {transform_indices = @transform_12, window_bounds = array<i64: 1, 1, 32>}, {transform_indices = @transform_13, window_bounds = array<i64: 1, 1, 32>}, {transform_indices = @transform_14, window_bounds = array<i64: 1, 2, 8, 32>}]} {
    %c0_i32 = arith.constant 0 : i32
    %0 = arith.cmpi eq, %arg0, %c0_i32 : i32
    %1 = arith.extui %0 : i1 to i32
    %c0_i32_0 = arith.constant 0 : i32
    %2 = arith.cmpi ne, %1, %c0_i32_0 : i32
    scf.if %2 {
      %c0_70 = arith.constant 0 : index
      %c0_71 = arith.constant 0 : index
      %c0_72 = arith.constant 0 : index
      %175 = vector.load %arg1[%c0_70, %c0_71, %c0_72] : memref<2x8x32xf32, #tpu.memory_space<vmem>>, vector<2x8x32xf32>
      %c0_73 = arith.constant 0 : index
      %c0_74 = arith.constant 0 : index
      %c0_75 = arith.constant 0 : index
      %176 = vector.load %arg16[%c0_73, %c0_74, %c0_75] : memref<2x8x32xf32, #tpu.memory_space<vmem>>, vector<2x8x32xf32>
      tpu.vector_store %arg16[%c0_73, %c0_74, %c0_75], %175 {strides = array<i32>} : memref<2x8x32xf32, #tpu.memory_space<vmem>>, vector<2x8x32xf32>,
    } else {
    }
    %c0 = arith.constant 0 : index
    %c0_1 = arith.constant 0 : index
    %c0_2 = arith.constant 0 : index
    %3 = vector.load %arg16[%c0, %c0_1, %c0_2] : memref<2x8x32xf32, #tpu.memory_space<vmem>>, vector<2x8x32xf32>
    %4 = vector.shape_cast %3 : vector<2x8x32xf32> to vector<16x32xf32>
    %5 = arith.truncf %4 : vector<16x32xf32> to vector<16x32xbf16>
    %c0_3 = arith.constant 0 : index
    %c0_4 = arith.constant 0 : index
    %c0_5 = arith.constant 0 : index
    %6 = vector.load %arg3[%c0_3, %c0_4, %c0_5] : memref<1x32x96xbf16, #tpu.memory_space<vmem>>, vector<1x32x96xbf16>
    %7 = vector.shape_cast %6 : vector<1x32x96xbf16> to vector<32x96xbf16>
    %cst = arith.constant dense<0.000000e+00> : vector<16x96xf32>
    %8 = tpu.matmul %5, %7, %cst {dimension_numbers = #tpu.dot_dimension_numbers<[1], [0], [0], [1], [0, 0, 1, 1], [], []>} : vector<16x32xbf16>, vector<32x96xbf16>, vector<16x96xf32> -> vector<16x96xf32>
    %c0_6 = arith.constant 0 : index
    %c0_7 = arith.constant 0 : index
    %c0_8 = arith.constant 0 : index
    %9 = vector.load %arg4[%c0_6, %c0_7, %c0_8] : memref<1x1x96xf32, #tpu.memory_space<vmem>>, vector<1x1x96xf32>
    %10 = vector.shape_cast %9 : vector<1x1x96xf32> to vector<1x96xf32>
    %11 = vector.broadcast %10 : vector<1x96xf32> to vector<16x96xf32>
    %12 = arith.addf %8, %11 : vector<16x96xf32>
    %13 = vector.extract_strided_slice %12 {offsets = [0, 0], sizes = [16, 32], strides = [1, 1]} : vector<16x96xf32> to vector<16x32xf32>
    %14 = vector.shape_cast %13 : vector<16x32xf32> to vector<2x8x32xf32>
    %15 = vector.extract_strided_slice %14 {offsets = [0, 0, 0], sizes = [2, 8, 8], strides = [1, 1, 1]} : vector<2x8x32xf32> to vector<2x8x8xf32>
    %16 = vector.extract_strided_slice %14 {offsets = [0, 0, 8], sizes = [2, 8, 8], strides = [1, 1, 1]} : vector<2x8x32xf32> to vector<2x8x8xf32>
    %17 = vector.extract_strided_slice %14 {offsets = [0, 0, 16], sizes = [2, 8, 8], strides = [1, 1, 1]} : vector<2x8x32xf32> to vector<2x8x8xf32>
    %18 = vector.extract_strided_slice %14 {offsets = [0, 0, 24], sizes = [2, 8, 8], strides = [1, 1, 1]} : vector<2x8x32xf32> to vector<2x8x8xf32>
    %19 = vector.shape_cast %15 : vector<2x8x8xf32> to vector<2x1x8x8xf32>
    %20 = vector.shape_cast %16 : vector<2x8x8xf32> to vector<2x1x8x8xf32>
    %21 = vector.shape_cast %17 : vector<2x8x8xf32> to vector<2x1x8x8xf32>
    %22 = vector.shape_cast %18 : vector<2x8x8xf32> to vector<2x1x8x8xf32>
    %23 = tpu.concatenate %19, %20, %21, %22 in 1 : vector<2x1x8x8xf32>, vector<2x1x8x8xf32>, vector<2x1x8x8xf32>, vector<2x1x8x8xf32> -> vector<2x4x8x8xf32>
    %24 = vector.shape_cast %23 : vector<2x4x8x8xf32> to vector<8x8x8xf32>
    %25 = arith.truncf %24 : vector<8x8x8xf32> to vector<8x8x8xbf16>
    %26 = vector.extract_strided_slice %12 {offsets = [0, 32], sizes = [16, 32], strides = [1, 1]} : vector<16x96xf32> to vector<16x32xf32>
    %27 = vector.shape_cast %26 : vector<16x32xf32> to vector<2x8x32xf32>
    %28 = vector.extract_strided_slice %27 {offsets = [0, 0, 0], sizes = [2, 8, 8], strides = [1, 1, 1]} : vector<2x8x32xf32> to vector<2x8x8xf32>
    %29 = vector.extract_strided_slice %27 {offsets = [0, 0, 8], sizes = [2, 8, 8], strides = [1, 1, 1]} : vector<2x8x32xf32> to vector<2x8x8xf32>
    %30 = vector.extract_strided_slice %27 {offsets = [0, 0, 16], sizes = [2, 8, 8], strides = [1, 1, 1]} : vector<2x8x32xf32> to vector<2x8x8xf32>
    %31 = vector.extract_strided_slice %27 {offsets = [0, 0, 24], sizes = [2, 8, 8], strides = [1, 1, 1]} : vector<2x8x32xf32> to vector<2x8x8xf32>
    %32 = vector.shape_cast %28 : vector<2x8x8xf32> to vector<2x1x8x8xf32>
    %33 = vector.shape_cast %29 : vector<2x8x8xf32> to vector<2x1x8x8xf32>
    %34 = vector.shape_cast %30 : vector<2x8x8xf32> to vector<2x1x8x8xf32>
    %35 = vector.shape_cast %31 : vector<2x8x8xf32> to vector<2x1x8x8xf32>
    %36 = tpu.concatenate %32, %33, %34, %35 in 1 : vector<2x1x8x8xf32>, vector<2x1x8x8xf32>, vector<2x1x8x8xf32>, vector<2x1x8x8xf32> -> vector<2x4x8x8xf32>
    %37 = vector.shape_cast %36 : vector<2x4x8x8xf32> to vector<8x8x8xf32>
    %38 = arith.truncf %37 : vector<8x8x8xf32> to vector<8x8x8xbf16>
    %39 = vector.extract_strided_slice %12 {offsets = [0, 64], sizes = [16, 32], strides = [1, 1]} : vector<16x96xf32> to vector<16x32xf32>
    %40 = vector.shape_cast %39 : vector<16x32xf32> to vector<2x8x32xf32>
    %41 = vector.extract_strided_slice %40 {offsets = [0, 0, 0], sizes = [2, 8, 8], strides = [1, 1, 1]} : vector<2x8x32xf32> to vector<2x8x8xf32>
    %42 = vector.extract_strided_slice %40 {offsets = [0, 0, 8], sizes = [2, 8, 8], strides = [1, 1, 1]} : vector<2x8x32xf32> to vector<2x8x8xf32>
    %43 = vector.extract_strided_slice %40 {offsets = [0, 0, 16], sizes = [2, 8, 8], strides = [1, 1, 1]} : vector<2x8x32xf32> to vector<2x8x8xf32>
    %44 = vector.extract_strided_slice %40 {offsets = [0, 0, 24], sizes = [2, 8, 8], strides = [1, 1, 1]} : vector<2x8x32xf32> to vector<2x8x8xf32>
    %45 = vector.shape_cast %41 : vector<2x8x8xf32> to vector<2x1x8x8xf32>
    %46 = vector.shape_cast %42 : vector<2x8x8xf32> to vector<2x1x8x8xf32>
    %47 = vector.shape_cast %43 : vector<2x8x8xf32> to vector<2x1x8x8xf32>
    %48 = vector.shape_cast %44 : vector<2x8x8xf32> to vector<2x1x8x8xf32>
    %49 = tpu.concatenate %45, %46, %47, %48 in 1 : vector<2x1x8x8xf32>, vector<2x1x8x8xf32>, vector<2x1x8x8xf32>, vector<2x1x8x8xf32> -> vector<2x4x8x8xf32>
    %50 = vector.shape_cast %49 : vector<2x4x8x8xf32> to vector<8x8x8xf32>
    %51 = arith.truncf %50 : vector<8x8x8xf32> to vector<8x8x8xbf16>
    "tpu.trace_start"() <{level = 10 : i32, message = "gqd,gkd->gqk"}> : () -> ()
    %cst_9 = arith.constant dense<0.000000e+00> : vector<8x8x8xf32>
    %52 = tpu.matmul %25, %38, %cst_9 {dimension_numbers = #tpu.dot_dimension_numbers<[2], [2], [1], [1], [0, 0, 0, 1, 1, 1], [0], [0]>} : vector<8x8x8xbf16>, vector<8x8x8xbf16>, vector<8x8x8xf32> -> vector<8x8x8xf32>
    "tpu.trace_stop"() : () -> ()
    %cst_10 = arith.constant 0.353553385 : f32
    %53 = vector.broadcast %cst_10 : f32 to vector<8x8x8xf32>
    %54 = arith.mulf %52, %53 : vector<8x8x8xf32>
    %55 = vector.shape_cast %54 : vector<8x8x8xf32> to vector<2x4x8x8xf32>
    %c0_11 = arith.constant 0 : index
    %c0_12 = arith.constant 0 : index
    %c0_13 = arith.constant 0 : index
    %56 = vector.load %arg2[%c0_11, %c0_12, %c0_13] : memref<2x1x8xf32, #tpu.memory_space<vmem>>, vector<2x1x8xf32>
    %57 = vector.shape_cast %56 : vector<2x1x8xf32> to vector<2x1x1x8xf32>
    %58 = vector.broadcast %57 : vector<2x1x1x8xf32> to vector<2x4x8x8xf32>
    %59 = arith.addf %55, %58 : vector<2x4x8x8xf32>
    %cst_14 = arith.constant dense<0xFF800000> : vector<2x4x8xf32>
    %60 = vector.multi_reduction <maximumf>, %59, %cst_14 [3] : vector<2x4x8x8xf32> to vector<2x4x8xf32>
    %61 = vector.shape_cast %60 : vector<2x4x8xf32> to vector<2x4x8x1xf32>
    %62 = vector.broadcast %61 : vector<2x4x8x1xf32> to vector<2x4x8x8xf32>
    %63 = arith.subf %59, %62 : vector<2x4x8x8xf32>
    %64 = math.exp %63 : vector<2x4x8x8xf32>
    %cst_15 = arith.constant dense<0.000000e+00> : vector<2x4x8xf32>
    %65 = vector.multi_reduction <add>, %64, %cst_15 [3] : vector<2x4x8x8xf32> to vector<2x4x8xf32>
    %66 = vector.shape_cast %65 : vector<2x4x8xf32> to vector<2x4x8x1xf32>
    %67 = tpu.reciprocal %66 {approx = true} : vector<2x4x8x1xf32> -> vector<2x4x8x1xf32>
    %68 = vector.broadcast %67 : vector<2x4x8x1xf32> to vector<2x4x8x8xf32>
    %69 = arith.mulf %64, %68 : vector<2x4x8x8xf32>
    %70 = vector.shape_cast %69 : vector<2x4x8x8xf32> to vector<8x8x8xf32>
    %71 = arith.truncf %70 : vector<8x8x8xf32> to vector<8x8x8xbf16>
    "tpu.trace_start"() <{level = 10 : i32, message = "gqk,gkd->gqd"}> : () -> ()
    %cst_16 = arith.constant dense<0.000000e+00> : vector<8x8x8xf32>
    %72 = tpu.matmul %71, %51, %cst_16 {dimension_numbers = #tpu.dot_dimension_numbers<[2], [1], [1], [2], [0, 0, 0, 1, 1, 2], [0], [0]>} : vector<8x8x8xbf16>, vector<8x8x8xbf16>, vector<8x8x8xf32> -> vector<8x8x8xf32>
    "tpu.trace_stop"() : () -> ()
    %73 = vector.shape_cast %72 : vector<8x8x8xf32> to vector<2x4x8x8xf32>
    %74 = vector.extract_strided_slice %73 {offsets = [0, 0, 0, 0], sizes = [2, 1, 8, 8], strides = [1, 1, 1, 1]} : vector<2x4x8x8xf32> to vector<2x1x8x8xf32>
    %75 = vector.shape_cast %74 : vector<2x1x8x8xf32> to vector<2x8x8xf32>
    %76 = vector.extract_strided_slice %73 {offsets = [0, 1, 0, 0], sizes = [2, 1, 8, 8], strides = [1, 1, 1, 1]} : vector<2x4x8x8xf32> to vector<2x1x8x8xf32>
    %77 = vector.shape_cast %76 : vector<2x1x8x8xf32> to vector<2x8x8xf32>
    %78 = vector.extract_strided_slice %73 {offsets = [0, 2, 0, 0], sizes = [2, 1, 8, 8], strides = [1, 1, 1, 1]} : vector<2x4x8x8xf32> to vector<2x1x8x8xf32>
    %79 = vector.shape_cast %78 : vector<2x1x8x8xf32> to vector<2x8x8xf32>
    %80 = vector.extract_strided_slice %73 {offsets = [0, 3, 0, 0], sizes = [2, 1, 8, 8], strides = [1, 1, 1, 1]} : vector<2x4x8x8xf32> to vector<2x1x8x8xf32>
    %81 = vector.shape_cast %80 : vector<2x1x8x8xf32> to vector<2x8x8xf32>
    %82 = tpu.concatenate %75, %77, %79, %81 in 2 : vector<2x8x8xf32>, vector<2x8x8xf32>, vector<2x8x8xf32>, vector<2x8x8xf32> -> vector<2x8x32xf32>
    %83 = vector.shape_cast %82 : vector<2x8x32xf32> to vector<16x32xf32>
    %84 = arith.truncf %83 : vector<16x32xf32> to vector<16x32xbf16>
    %c0_17 = arith.constant 0 : index
    %c0_18 = arith.constant 0 : index
    %c0_19 = arith.constant 0 : index
    %85 = vector.load %arg5[%c0_17, %c0_18, %c0_19] : memref<1x32x32xbf16, #tpu.memory_space<vmem>>, vector<1x32x32xbf16>
    %86 = vector.shape_cast %85 : vector<1x32x32xbf16> to vector<32x32xbf16>
    %cst_20 = arith.constant dense<0.000000e+00> : vector<16x32xf32>
    %87 = tpu.matmul %84, %86, %cst_20 {dimension_numbers = #tpu.dot_dimension_numbers<[1], [0], [0], [1], [0, 0, 1, 1], [], []>} : vector<16x32xbf16>, vector<32x32xbf16>, vector<16x32xf32> -> vector<16x32xf32>
    %c0_21 = arith.constant 0 : index
    %c0_22 = arith.constant 0 : index
    %c0_23 = arith.constant 0 : index
    %88 = vector.load %arg6[%c0_21, %c0_22, %c0_23] : memref<1x1x32xf32, #tpu.memory_space<vmem>>, vector<1x1x32xf32>
    %89 = vector.shape_cast %88 : vector<1x1x32xf32> to vector<1x32xf32>
    %90 = vector.broadcast %89 : vector<1x32xf32> to vector<16x32xf32>
    %91 = arith.addf %87, %90 : vector<16x32xf32>
    %92 = arith.addf %91, %4 : vector<16x32xf32>
    %c0_24 = arith.constant 0 : index
    %c0_25 = arith.constant 0 : index
    %c0_26 = arith.constant 0 : index
    %93 = vector.load %arg7[%c0_24, %c0_25, %c0_26] : memref<1x1x32xf32, #tpu.memory_space<vmem>>, vector<1x1x32xf32>
    %94 = vector.shape_cast %93 : vector<1x1x32xf32> to vector<1x32xf32>
    %c0_27 = arith.constant 0 : index
    %c0_28 = arith.constant 0 : index
    %c0_29 = arith.constant 0 : index
    %95 = vector.load %arg8[%c0_27, %c0_28, %c0_29] : memref<1x1x32xf32, #tpu.memory_space<vmem>>, vector<1x1x32xf32>
    %96 = vector.shape_cast %95 : vector<1x1x32xf32> to vector<1x32xf32>
    %cst_30 = arith.constant dense<0.000000e+00> : vector<16xf32>
    %97 = vector.multi_reduction <add>, %92, %cst_30 [1] : vector<16x32xf32> to vector<16xf32>
    %98 = vector.shape_cast %97 : vector<16xf32> to vector<16x1xf32>
    %cst_31 = arith.constant 3.200000e+01 : f32
    %99 = vector.broadcast %cst_31 : f32 to vector<16x1xf32>
    %100 = arith.divf %98, %99 : vector<16x1xf32>
    %101 = vector.broadcast %100 : vector<16x1xf32> to vector<16x32xf32>
    %102 = arith.subf %92, %101 : vector<16x32xf32>
    %103 = arith.mulf %102, %102 : vector<16x32xf32>
    %cst_32 = arith.constant dense<0.000000e+00> : vector<16xf32>
    %104 = vector.multi_reduction <add>, %103, %cst_32 [1] : vector<16x32xf32> to vector<16xf32>
    %105 = vector.shape_cast %104 : vector<16xf32> to vector<16x1xf32>
    %cst_33 = arith.constant 3.200000e+01 : f32
    %106 = vector.broadcast %cst_33 : f32 to vector<16x1xf32>
    %107 = arith.divf %105, %106 : vector<16x1xf32>
    %108 = vector.broadcast %100 : vector<16x1xf32> to vector<16x32xf32>
    %109 = arith.subf %92, %108 : vector<16x32xf32>
    %cst_34 = arith.constant 9.99999996E-13 : f32
    %110 = vector.broadcast %cst_34 : f32 to vector<16x1xf32>
    %111 = arith.addf %107, %110 : vector<16x1xf32>
    %112 = math.rsqrt %111 : vector<16x1xf32>
    %113 = vector.broadcast %112 : vector<16x1xf32> to vector<16x32xf32>
    %114 = arith.mulf %109, %113 : vector<16x32xf32>
    %115 = vector.broadcast %94 : vector<1x32xf32> to vector<16x32xf32>
    %116 = arith.mulf %115, %114 : vector<16x32xf32>
    %117 = vector.broadcast %96 : vector<1x32xf32> to vector<16x32xf32>
    %118 = arith.addf %116, %117 : vector<16x32xf32>
    %119 = arith.truncf %118 : vector<16x32xf32> to vector<16x32xbf16>
    %c0_35 = arith.constant 0 : index
    %c0_36 = arith.constant 0 : index
    %c0_37 = arith.constant 0 : index
    %120 = vector.load %arg9[%c0_35, %c0_36, %c0_37] : memref<1x32x64xbf16, #tpu.memory_space<vmem>>, vector<1x32x64xbf16>
    %121 = vector.shape_cast %120 : vector<1x32x64xbf16> to vector<32x64xbf16>
    %cst_38 = arith.constant dense<0.000000e+00> : vector<16x64xf32>
    %122 = tpu.matmul %119, %121, %cst_38 {dimension_numbers = #tpu.dot_dimension_numbers<[1], [0], [0], [1], [0, 0, 1, 1], [], []>} : vector<16x32xbf16>, vector<32x64xbf16>, vector<16x64xf32> -> vector<16x64xf32>
    %c0_39 = arith.constant 0 : index
    %c0_40 = arith.constant 0 : index
    %c0_41 = arith.constant 0 : index
    %123 = vector.load %arg10[%c0_39, %c0_40, %c0_41] : memref<1x1x64xf32, #tpu.memory_space<vmem>>, vector<1x1x64xf32>
    %124 = vector.shape_cast %123 : vector<1x1x64xf32> to vector<1x64xf32>
    %125 = vector.broadcast %124 : vector<1x64xf32> to vector<16x64xf32>
    %126 = arith.addf %122, %125 : vector<16x64xf32>
    %cst_42 = arith.constant 5.000000e-01 : f32
    %127 = vector.broadcast %cst_42 : f32 to vector<16x64xf32>
    %128 = arith.mulf %126, %127 : vector<16x64xf32>
    %cst_43 = arith.constant 1.41421354 : f32
    %129 = vector.broadcast %cst_43 : f32 to vector<16x64xf32>
    %130 = arith.divf %126, %129 : vector<16x64xf32>
    %131 = math.erf %130 : vector<16x64xf32>
    %cst_44 = arith.constant 1.000000e+00 : f32
    %132 = vector.broadcast %cst_44 : f32 to vector<16x64xf32>
    %133 = arith.addf %132, %131 : vector<16x64xf32>
    %134 = arith.mulf %128, %133 : vector<16x64xf32>
    %135 = arith.truncf %134 : vector<16x64xf32> to vector<16x64xbf16>
    %c0_45 = arith.constant 0 : index
    %c0_46 = arith.constant 0 : index
    %c0_47 = arith.constant 0 : index
    %136 = vector.load %arg11[%c0_45, %c0_46, %c0_47] : memref<1x64x32xbf16, #tpu.memory_space<vmem>>, vector<1x64x32xbf16>
    %137 = vector.shape_cast %136 : vector<1x64x32xbf16> to vector<64x32xbf16>
    %cst_48 = arith.constant dense<0.000000e+00> : vector<16x32xf32>
    %138 = tpu.matmul %135, %137, %cst_48 {dimension_numbers = #tpu.dot_dimension_numbers<[1], [0], [0], [1], [0, 0, 1, 1], [], []>} : vector<16x64xbf16>, vector<64x32xbf16>, vector<16x32xf32> -> vector<16x32xf32>
    %c0_49 = arith.constant 0 : index
    %c0_50 = arith.constant 0 : index
    %c0_51 = arith.constant 0 : index
    %139 = vector.load %arg12[%c0_49, %c0_50, %c0_51] : memref<1x1x32xf32, #tpu.memory_space<vmem>>, vector<1x1x32xf32>
    %140 = vector.shape_cast %139 : vector<1x1x32xf32> to vector<1x32xf32>
    %141 = vector.broadcast %140 : vector<1x32xf32> to vector<16x32xf32>
    %142 = arith.addf %138, %141 : vector<16x32xf32>
    %143 = arith.addf %142, %118 : vector<16x32xf32>
    %c0_52 = arith.constant 0 : index
    %c0_53 = arith.constant 0 : index
    %c0_54 = arith.constant 0 : index
    %144 = vector.load %arg13[%c0_52, %c0_53, %c0_54] : memref<1x1x32xf32, #tpu.memory_space<vmem>>, vector<1x1x32xf32>
    %145 = vector.shape_cast %144 : vector<1x1x32xf32> to vector<1x32xf32>
    %c0_55 = arith.constant 0 : index
    %c0_56 = arith.constant 0 : index
    %c0_57 = arith.constant 0 : index
    %146 = vector.load %arg14[%c0_55, %c0_56, %c0_57] : memref<1x1x32xf32, #tpu.memory_space<vmem>>, vector<1x1x32xf32>
    %147 = vector.shape_cast %146 : vector<1x1x32xf32> to vector<1x32xf32>
    %cst_58 = arith.constant dense<0.000000e+00> : vector<16xf32>
    %148 = vector.multi_reduction <add>, %143, %cst_58 [1] : vector<16x32xf32> to vector<16xf32>
    %149 = vector.shape_cast %148 : vector<16xf32> to vector<16x1xf32>
    %cst_59 = arith.constant 3.200000e+01 : f32
    %150 = vector.broadcast %cst_59 : f32 to vector<16x1xf32>
    %151 = arith.divf %149, %150 : vector<16x1xf32>
    %152 = vector.broadcast %151 : vector<16x1xf32> to vector<16x32xf32>
    %153 = arith.subf %143, %152 : vector<16x32xf32>
    %154 = arith.mulf %153, %153 : vector<16x32xf32>
    %cst_60 = arith.constant dense<0.000000e+00> : vector<16xf32>
    %155 = vector.multi_reduction <add>, %154, %cst_60 [1] : vector<16x32xf32> to vector<16xf32>
    %156 = vector.shape_cast %155 : vector<16xf32> to vector<16x1xf32>
    %cst_61 = arith.constant 3.200000e+01 : f32
    %157 = vector.broadcast %cst_61 : f32 to vector<16x1xf32>
    %158 = arith.divf %156, %157 : vector<16x1xf32>
    %159 = vector.broadcast %151 : vector<16x1xf32> to vector<16x32xf32>
    %160 = arith.subf %143, %159 : vector<16x32xf32>
    %cst_62 = arith.constant 9.99999996E-13 : f32
    %161 = vector.broadcast %cst_62 : f32 to vector<16x1xf32>
    %162 = arith.addf %158, %161 : vector<16x1xf32>
    %163 = math.rsqrt %162 : vector<16x1xf32>
    %164 = vector.broadcast %163 : vector<16x1xf32> to vector<16x32xf32>
    %165 = arith.mulf %160, %164 : vector<16x32xf32>
    %166 = vector.broadcast %145 : vector<1x32xf32> to vector<16x32xf32>
    %167 = arith.mulf %166, %165 : vector<16x32xf32>
    %168 = vector.broadcast %147 : vector<1x32xf32> to vector<16x32xf32>
    %169 = arith.addf %167, %168 : vector<16x32xf32>
    %170 = vector.shape_cast %169 : vector<16x32xf32> to vector<2x8x32xf32>
    %c0_63 = arith.constant 0 : index
    %c0_64 = arith.constant 0 : index
    %c0_65 = arith.constant 0 : index
    %171 = vector.load %arg16[%c0_63, %c0_64, %c0_65] : memref<2x8x32xf32, #tpu.memory_space<vmem>>, vector<2x8x32xf32>
    tpu.vector_store %arg16[%c0_63, %c0_64, %c0_65], %170 {strides = array<i32>} : memref<2x8x32xf32, #tpu.memory_space<vmem>>, vector<2x8x32xf32>,
    %c0_66 = arith.constant 0 : index
    %c0_67 = arith.constant 0 : index
    %c0_68 = arith.constant 0 : index
    %c0_69 = arith.constant 0 : index
    %172 = vector.load %arg15[%c0_66, %c0_67, %c0_68, %c0_69] : memref<1x2x8x32xf32, #tpu.memory_space<vmem>>, vector<1x2x8x32xf32>
    %173 = vector.shape_cast %172 : vector<1x2x8x32xf32> to vector<2x8x32xf32>
    %174 = vector.shape_cast %170 : vector<2x8x32xf32> to vector<1x2x8x32xf32>
    tpu.vector_store %arg15[%c0_66, %c0_67, %c0_68, %c0_69], %174 {strides = array<i32>} : memref<1x2x8x32xf32, #tpu.memory_space<vmem>>, vector<1x2x8x32xf32>,
    return
  }
  func.func @transform_0(%arg0: i32) -> (i32, i32, i32) {
    %c0_i32 = arith.constant 0 : i32
    %c0_i32_0 = arith.constant 0 : i32
    %c0_i32_1 = arith.constant 0 : i32
    %c0_i32_2 = arith.constant 0 : i32
    return %c0_i32, %c0_i32_0, %c0_i32_1 : i32, i32, i32
  }
  func.func @transform_1(%arg0: i32) -> (i32, i32, i32) {
    %c0_i32 = arith.constant 0 : i32
    %c0_i32_0 = arith.constant 0 : i32
    %c0_i32_1 = arith.constant 0 : i32
    %c0_i32_2 = arith.constant 0 : i32
    return %c0_i32, %c0_i32_0, %c0_i32_1 : i32, i32, i32
  }
  func.func @transform_2(%arg0: i32) -> (i32, i32, i32) {
    %c0_i32 = arith.constant 0 : i32
    %c0_i32_0 = arith.constant 0 : i32
    %c0_i32_1 = arith.constant 0 : i32
    return %arg0, %c0_i32, %c0_i32_0 : i32, i32, i32
  }
  func.func @transform_3(%arg0: i32) -> (i32, i32, i32) {
    %c0_i32 = arith.constant 0 : i32
    %c0_i32_0 = arith.constant 0 : i32
    %c0_i32_1 = arith.constant 0 : i32
    return %arg0, %c0_i32, %c0_i32_0 : i32, i32, i32
  }
  func.func @transform_4(%arg0: i32) -> (i32, i32, i32) {
    %c0_i32 = arith.constant 0 : i32
    %c0_i32_0 = arith.constant 0 : i32
    %c0_i32_1 = arith.constant 0 : i32
    return %arg0, %c0_i32, %c0_i32_0 : i32, i32, i32
  }
  func.func @transform_5(%arg0: i32) -> (i32, i32, i32) {
    %c0_i32 = arith.constant 0 : i32
    %c0_i32_0 = arith.constant 0 : i32
    %c0_i32_1 = arith.constant 0 : i32
    return %arg0, %c0_i32, %c0_i32_0 : i32, i32, i32
  }
  func.func @transform_6(%arg0: i32) -> (i32, i32, i32) {
    %c0_i32 = arith.constant 0 : i32
    %c0_i32_0 = arith.constant 0 : i32
    %c0_i32_1 = arith.constant 0 : i32
    return %arg0, %c0_i32, %c0_i32_0 : i32, i32, i32
  }
  func.func @transform_7(%arg0: i32) -> (i32, i32, i32) {
    %c0_i32 = arith.constant 0 : i32
    %c0_i32_0 = arith.constant 0 : i32
    %c0_i32_1 = arith.constant 0 : i32
    return %arg0, %c0_i32, %c0_i32_0 : i32, i32, i32
  }
  func.func @transform_8(%arg0: i32) -> (i32, i32, i32) {
    %c0_i32 = arith.constant 0 : i32
    %c0_i32_0 = arith.constant 0 : i32
    %c0_i32_1 = arith.constant 0 : i32
    return %arg0, %c0_i32, %c0_i32_0 : i32, i32, i32
  }
  func.func @transform_9(%arg0: i32) -> (i32, i32, i32) {
    %c0_i32 = arith.constant 0 : i32
    %c0_i32_0 = arith.constant 0 : i32
    %c0_i32_1 = arith.constant 0 : i32
    return %arg0, %c0_i32, %c0_i32_0 : i32, i32, i32
  }
  func.func @transform_10(%arg0: i32) -> (i32, i32, i32) {
    %c0_i32 = arith.constant 0 : i32
    %c0_i32_0 = arith.constant 0 : i32
    %c0_i32_1 = arith.constant 0 : i32
    return %arg0, %c0_i32, %c0_i32_0 : i32, i32, i32
  }
  func.func @transform_11(%arg0: i32) -> (i32, i32, i32) {
    %c0_i32 = arith.constant 0 : i32
    %c0_i32_0 = arith.constant 0 : i32
    %c0_i32_1 = arith.constant 0 : i32
    return %arg0, %c0_i32, %c0_i32_0 : i32, i32, i32
  }
  func.func @transform_12(%arg0: i32) -> (i32, i32, i32) {
    %c0_i32 = arith.constant 0 : i32
    %c0_i32_0 = arith.constant 0 : i32
    %c0_i32_1 = arith.constant 0 : i32
    return %arg0, %c0_i32, %c0_i32_0 : i32, i32, i32
  }
  func.func @transform_13(%arg0: i32) -> (i32, i32, i32) {
    %c0_i32 = arith.constant 0 : i32
    %c0_i32_0 = arith.constant 0 : i32
    %c0_i32_1 = arith.constant 0 : i32
    return %arg0, %c0_i32, %c0_i32_0 : i32, i32, i32
  }
  func.func @transform_14(%arg0: i32) -> (i32, i32, i32, i32) {
    %c0_i32 = arith.constant 0 : i32
    %c0_i32_0 = arith.constant 0 : i32
    %c0_i32_1 = arith.constant 0 : i32
    %c0_i32_2 = arith.constant 0 : i32
    return %arg0, %c0_i32, %c0_i32_0, %c0_i32_1 : i32, i32, i32, i32
  }
}

</mosaic_0001>

<llo_original>
// kernel: tpu_custom_call.1
$region0: #{tpu_custom_call.1}
  #allocation0 [shape = 'u32[]', space=smem, size = 0x4, offset = 0x4, fixed_abs, tag = 'smem constant byte address 0x4 - core index']
  #allocation1 [shape = 'u32[144,128]{1,0:T(1,128)}', space=vmem, size = 0x12000, scoped, tag = 'internal scratch']
  #allocation2 [shape = 'f32[2,8,32]{2,1,0:T(8,128)}', space=vmem, size = 0x2000, scoped, tag = 'scratch operand']
  %s0 = inlined_call_operand.hbm [shape: f32[2,8,32], index: 0, kind: input, shape index: {}]
  %s1 = inlined_call_operand.hbm [shape: f32[2,1,8], index: 1, kind: input, shape index: {}]
  %s2 = inlined_call_operand.vmem [shape: bf16[2,32,96], index: 2, kind: input, shape index: {}]
  %s3 = inlined_call_operand.vmem [shape: f32[2,1,96], index: 3, kind: input, shape index: {}]
  %s4 = inlined_call_operand.vmem [shape: bf16[2,32,32], index: 4, kind: input, shape index: {}]
  %s5 = inlined_call_operand.vmem [shape: f32[2,1,32], index: 5, kind: input, shape index: {}]
  %s6 = inlined_call_operand.vmem [shape: f32[2,1,32], index: 6, kind: input, shape index: {}]
  %s7 = inlined_call_operand.vmem [shape: f32[2,1,32], index: 7, kind: input, shape index: {}]
  %s8 = inlined_call_operand.vmem [shape: bf16[2,32,64], index: 8, kind: input, shape index: {}]
  %s9 = inlined_call_operand.vmem [shape: f32[2,1,64], index: 9, kind: input, shape index: {}]
  %s10 = inlined_call_operand.vmem [shape: bf16[2,64,32], index: 10, kind: input, shape index: {}]
  %s11 = inlined_call_operand.vmem [shape: f32[2,1,32], index: 11, kind: input, shape index: {}]
  %s12 = inlined_call_operand.vmem [shape: f32[2,1,32], index: 12, kind: input, shape index: {}]
  %s13 = inlined_call_operand.vmem [shape: f32[2,1,32], index: 13, kind: input, shape index: {}]
  %s14 = inlined_call_operand.hbm [shape: f32[2,2,8,32], index: 14, kind: output, shape index: {}]
  %s15 = sld [smem:[#allocation0]]
  $region101: #{tpu_custom_call.1} parent=0
    _
  %s17 = ssub.s32 1, %s15
  %s18 = scalar_select 0, %s17, %s15
  $region1: #{tpu_custom_call.1} parent=0
    #allocation3 [shape = 'u8[8192]{0}', space=vmem, size = 0x2000, scoped, tag = 'input window, operand 0, single buffered']
    #allocation4 [shape = 's32[2]{0}', space=sflag, size = 0x8, scoped, tag = 'scoped memory for tpu_custom_call.1']
    #allocation5 [shape = 's32[2]{0}', space=sflag, size = 0x8, scoped, tag = 'scoped memory for tpu_custom_call.1']
    #allocation6 [shape = 'u8[1024]{0}', space=vmem, size = 0x400, scoped, tag = 'input window, operand 1, single buffered']
    #allocation7 [shape = 's32[1]{0}', space=sflag, size = 0x4, scoped, tag = 'scoped memory for tpu_custom_call.1']
    #allocation8 [shape = 'u8[16384]{0}', space=vmem, size = 0x4000, scoped, tag = 'output window, operand 0']
    %19 = vsyncpa [#allocation4], 0
    %20 = vsyncpa [#allocation7], 0
    %21 = vsyncpa [#allocation5], 0
    %s22 = scalar_lea.sflag [#allocation5], 1
    %23 = vsyncpa %s22, 0
    loop: start=0, step=1, limit=4
    $region2: #{tpu_custom_call.1} parent=1 // loop_pre_header
      _
    $region3: #{tpu_custom_call.1} parent=1 // loop_header
      %s25 = sphi 0, %s29
      %p26 = scmp.ge.s32.totalorder %s25, 4
      %s33 = sphi 0, %s33
      %s35 = sphi 0, %s33
      %s36 = sphi 0, %s35
      %s50 = sphi 0, %s36
      %s54 = sphi 0, %s54
      %s56 = sphi 0, %s54
      %s57 = sphi 0, %s56
      %s71 = sphi 0, %s57
      %s77 = sphi 0, %s79
      %s80 = sphi 0, %s77
      %s81 = sphi 0, %s80
      %s97 = sphi 0, %s81
      %s103 = sphi 0, %s105
      %s106 = sphi 0, %s103
      %s107 = sphi 0, %s106
      %s123 = sphi 0, %s107
      %s129 = sphi 0, %s131
      %s132 = sphi 0, %s129
      %s133 = sphi 0, %s132
      %s149 = sphi 0, %s133
      %s155 = sphi 0, %s157
      %s158 = sphi 0, %s155
      %s159 = sphi 0, %s158
      %s175 = sphi 0, %s159
      %s181 = sphi 0, %s183
      %s184 = sphi 0, %s181
      %s185 = sphi 0, %s184
      %s201 = sphi 0, %s185
      %s207 = sphi 0, %s209
      %s210 = sphi 0, %s207
      %s211 = sphi 0, %s210
      %s227 = sphi 0, %s211
      %s233 = sphi 0, %s235
      %s236 = sphi 0, %s233
      %s237 = sphi 0, %s236
      %s253 = sphi 0, %s237
      %s259 = sphi 0, %s261
      %s262 = sphi 0, %s259
      %s263 = sphi 0, %s262
      %s279 = sphi 0, %s263
      %s285 = sphi 0, %s287
      %s288 = sphi 0, %s285
      %s289 = sphi 0, %s288
      %s305 = sphi 0, %s289
      %s311 = sphi 0, %s313
      %s314 = sphi 0, %s311
      %s315 = sphi 0, %s314
      %s331 = sphi 0, %s315
      %s337 = sphi 0, %s339
      %s340 = sphi 0, %s337
      %s341 = sphi 0, %s340
      %s357 = sphi 0, %s341
      %s363 = sphi 0, %s365
      %s366 = sphi 0, %s363
      %s367 = sphi 0, %s366
      %s383 = sphi 0, %s367
      %s389 = sphi 0, %s391
      %s392 = sphi 0, %s389
      %s393 = sphi 0, %s392
      %s409 = sphi 0, %s393
    $region4: #{tpu_custom_call.1} parent=1 // loop_header_branch
      %28 = sbr.rel (%p26) target = $region8
    $region5: #{tpu_custom_call.1} parent=1 // loop_body
      %s30 = ssub.s32 %s25, 1
      %s31 = ssub.s32 %s25, 2
      %s32 = sadd.s32 %s25, 1
      %s34 = sadd.s32 %s33, 1
      %p37 = scmp.eq.s32.totalorder %s25, 1
      %p38 = scmp.ne.s32.totalorder %s33, %s35
      %p39 = scmp.eq.s32.totalorder %s25, 0
      %p40 = por %p38, %p39
      %p41 = scmp.ne.s32.totalorder %s33, %s35
      %p42 = scmp.eq.s32.totalorder %s30, 1
      %p43 = por %p41, %p42
      %p44 = scmp.ne.s32.totalorder %s35, %s36
      %p45 = scmp.eq.s32.totalorder %s30, 0
      %p46 = por %p44, %p45
      %p47 = scmp.ne.s32.totalorder %s35, %s36
      %p48 = scmp.eq.s32.totalorder %s31, 1
      %p49 = por %p47, %p48
      %p51 = scmp.ne.s32.totalorder %s36, %s50
      %p52 = scmp.eq.s32.totalorder %s31, 0
      %p53 = por %p51, %p52
      %s55 = sadd.s32 %s54, 1
      %p58 = scmp.eq.s32.totalorder %s25, 1
      %p59 = scmp.ne.s32.totalorder %s54, %s56
      %p60 = scmp.eq.s32.totalorder %s25, 0
      %p61 = por %p59, %p60
      %p62 = scmp.ne.s32.totalorder %s54, %s56
      %p63 = scmp.eq.s32.totalorder %s30, 1
      %p64 = por %p62, %p63
      %p65 = scmp.ne.s32.totalorder %s56, %s57
      %p66 = scmp.eq.s32.totalorder %s30, 0
      %p67 = por %p65, %p66
      %p68 = scmp.ne.s32.totalorder %s56, %s57
      %p69 = scmp.eq.s32.totalorder %s31, 1
      %p70 = por %p68, %p69
      %p72 = scmp.ne.s32.totalorder %s57, %s71
      %p73 = scmp.eq.s32.totalorder %s31, 0
      %p74 = por %p72, %p73
      %s75 = ssub.s32 %s25, %s32
      %p76 = scmp.eq.s32.totalorder %s75, 0
      %s78 = sadd.s32 %s77, 1
      %s79 = scalar_select %p76, %s77, %s78
      %p82 = pneg %p76
      %p83 = scmp.eq.s32.totalorder %s25, 1
      %p84 = por %p82, %p83
      %p85 = scmp.ne.s32.totalorder %s77, %s80
      %p86 = scmp.eq.s32.totalorder %s25, 0
      %p87 = por %p85, %p86
      %p88 = scmp.ne.s32.totalorder %s77, %s80
      %p89 = scmp.eq.s32.totalorder %s30, 1
      %p90 = por %p88, %p89
      %p91 = scmp.ne.s32.totalorder %s80, %s81
      %p92 = scmp.eq.s32.totalorder %s30, 0
      %p93 = por %p91, %p92
      %p94 = scmp.ne.s32.totalorder %s80, %s81
      %p95 = scmp.eq.s32.totalorder %s31, 1
      %p96 = por %p94, %p95
      %p98 = scmp.ne.s32.totalorder %s81, %s97
      %p99 = scmp.eq.s32.totalorder %s31, 0
      %p100 = por %p98, %p99
      %s101 = ssub.s32 %s25, %s32
      %p102 = scmp.eq.s32.totalorder %s101, 0
      %s104 = sadd.s32 %s103, 1
      %s105 = scalar_select %p102, %s103, %s104
      %p108 = pneg %p102
      %p109 = scmp.eq.s32.totalorder %s25, 1
      %p110 = por %p108, %p109
      %p111 = scmp.ne.s32.totalorder %s103, %s106
      %p112 = scmp.eq.s32.totalorder %s25, 0
      %p113 = por %p111, %p112
      %p114 = scmp.ne.s32.totalorder %s103, %s106
      %p115 = scmp.eq.s32.totalorder %s30, 1
      %p116 = por %p114, %p115
      %p117 = scmp.ne.s32.totalorder %s106, %s107
      %p118 = scmp.eq.s32.totalorder %s30, 0
      %p119 = por %p117, %p118
      %p120 = scmp.ne.s32.totalorder %s106, %s107
      %p121 = scmp.eq.s32.totalorder %s31, 1
      %p122 = por %p120, %p121
      %p124 = scmp.ne.s32.totalorder %s107, %s123
      %p125 = scmp.eq.s32.totalorder %s31, 0
      %p126 = por %p124, %p125
      %s127 = ssub.s32 %s25, %s32
      %p128 = scmp.eq.s32.totalorder %s127, 0
      %s130 = sadd.s32 %s129, 1
      %s131 = scalar_select %p128, %s129, %s130
      %p134 = pneg %p128
      %p135 = scmp.eq.s32.totalorder %s25, 1
      %p136 = por %p134, %p135
      %p137 = scmp.ne.s32.totalorder %s129, %s132
      %p138 = scmp.eq.s32.totalorder %s25, 0
      %p139 = por %p137, %p138
      %p140 = scmp.ne.s32.totalorder %s129, %s132
      %p141 = scmp.eq.s32.totalorder %s30, 1
      %p142 = por %p140, %p141
      %p143 = scmp.ne.s32.totalorder %s132, %s133
      %p144 = scmp.eq.s32.totalorder %s30, 0
      %p145 = por %p143, %p144
      %p146 = scmp.ne.s32.totalorder %s132, %s133
      %p147 = scmp.eq.s32.totalorder %s31, 1
      %p148 = por %p146, %p147
      %p150 = scmp.ne.s32.totalorder %s133, %s149
      %p151 = scmp.eq.s32.totalorder %s31, 0
      %p152 = por %p150, %p151
      %s153 = ssub.s32 %s25, %s32
      %p154 = scmp.eq.s32.totalorder %s153, 0
      %s156 = sadd.s32 %s155, 1
      %s157 = scalar_select %p154, %s155, %s156
      %p160 = pneg %p154
      %p161 = scmp.eq.s32.totalorder %s25, 1
      %p162 = por %p160, %p161
      %p163 = scmp.ne.s32.totalorder %s155, %s158
      %p164 = scmp.eq.s32.totalorder %s25, 0
      %p165 = por %p163, %p164
      %p166 = scmp.ne.s32.totalorder %s155, %s158
      %p167 = scmp.eq.s32.totalorder %s30, 1
      %p168 = por %p166, %p167
      %p169 = scmp.ne.s32.totalorder %s158, %s159
      %p170 = scmp.eq.s32.totalorder %s30, 0
      %p171 = por %p169, %p170
      %p172 = scmp.ne.s32.totalorder %s158, %s159
      %p173 = scmp.eq.s32.totalorder %s31, 1
      %p174 = por %p172, %p173
      %p176 = scmp.ne.s32.totalorder %s159, %s175
      %p177 = scmp.eq.s32.totalorder %s31, 0
      %p178 = por %p176, %p177
      %s179 = ssub.s32 %s25, %s32
      %p180 = scmp.eq.s32.totalorder %s179, 0
      %s182 = sadd.s32 %s181, 1
      %s183 = scalar_select %p180, %s181, %s182
      %p186 = pneg %p180
      %p187 = scmp.eq.s32.totalorder %s25, 1
      %p188 = por %p186, %p187
      %p189 = scmp.ne.s32.totalorder %s181, %s184
      %p190 = scmp.eq.s32.totalorder %s25, 0
      %p191 = por %p189, %p190
      %p192 = scmp.ne.s32.totalorder %s181, %s184
      %p193 = scmp.eq.s32.totalorder %s30, 1
      %p194 = por %p192, %p193
      %p195 = scmp.ne.s32.totalorder %s184, %s185
      %p196 = scmp.eq.s32.totalorder %s30, 0
      %p197 = por %p195, %p196
      %p198 = scmp.ne.s32.totalorder %s184, %s185
      %p199 = scmp.eq.s32.totalorder %s31, 1
      %p200 = por %p198, %p199
      %p202 = scmp.ne.s32.totalorder %s185, %s201
      %p203 = scmp.eq.s32.totalorder %s31, 0
      %p204 = por %p202, %p203
      %s205 = ssub.s32 %s25, %s32
      %p206 = scmp.eq.s32.totalorder %s205, 0
      %s208 = sadd.s32 %s207, 1
      %s209 = scalar_select %p206, %s207, %s208
      %p212 = pneg %p206
      %p213 = scmp.eq.s32.totalorder %s25, 1
      %p214 = por %p212, %p213
      %p215 = scmp.ne.s32.totalorder %s207, %s210
      %p216 = scmp.eq.s32.totalorder %s25, 0
      %p217 = por %p215, %p216
      %p218 = scmp.ne.s32.totalorder %s207, %s210
      %p219 = scmp.eq.s32.totalorder %s30, 1
      %p220 = por %p218, %p219
      %p221 = scmp.ne.s32.totalorder %s210, %s211
      %p222 = scmp.eq.s32.totalorder %s30, 0
      %p223 = por %p221, %p222
      %p224 = scmp.ne.s32.totalorder %s210, %s211
      %p225 = scmp.eq.s32.totalorder %s31, 1
      %p226 = por %p224, %p225
      %p228 = scmp.ne.s32.totalorder %s211, %s227
      %p229 = scmp.eq.s32.totalorder %s31, 0
      %p230 = por %p228, %p229
      %s231 = ssub.s32 %s25, %s32
      %p232 = scmp.eq.s32.totalorder %s231, 0
      %s234 = sadd.s32 %s233, 1
      %s235 = scalar_select %p232, %s233, %s234
      %p238 = pneg %p232
      %p239 = scmp.eq.s32.totalorder %s25, 1
      %p240 = por %p238, %p239
      %p241 = scmp.ne.s32.totalorder %s233, %s236
      %p242 = scmp.eq.s32.totalorder %s25, 0
      %p243 = por %p241, %p242
      %p244 = scmp.ne.s32.totalorder %s233, %s236
      %p245 = scmp.eq.s32.totalorder %s30, 1
      %p246 = por %p244, %p245
      %p247 = scmp.ne.s32.totalorder %s236, %s237
      %p248 = scmp.eq.s32.totalorder %s30, 0
      %p249 = por %p247, %p248
      %p250 = scmp.ne.s32.totalorder %s236, %s237
      %p251 = scmp.eq.s32.totalorder %s31, 1
      %p252 = por %p250, %p251
      %p254 = scmp.ne.s32.totalorder %s237, %s253
      %p255 = scmp.eq.s32.totalorder %s31, 0
      %p256 = por %p254, %p255
      %s257 = ssub.s32 %s25, %s32
      %p258 = scmp.eq.s32.totalorder %s257, 0
      %s260 = sadd.s32 %s259, 1
      %s261 = scalar_select %p258, %s259, %s260
      %p264 = pneg %p258
      %p265 = scmp.eq.s32.totalorder %s25, 1
      %p266 = por %p264, %p265
      %p267 = scmp.ne.s32.totalorder %s259, %s262
      %p268 = scmp.eq.s32.totalorder %s25, 0
      %p269 = por %p267, %p268
      %p270 = scmp.ne.s32.totalorder %s259, %s262
      %p271 = scmp.eq.s32.totalorder %s30, 1
      %p272 = por %p270, %p271
      %p273 = scmp.ne.s32.totalorder %s262, %s263
      %p274 = scmp.eq.s32.totalorder %s30, 0
      %p275 = por %p273, %p274
      %p276 = scmp.ne.s32.totalorder %s262, %s263
      %p277 = scmp.eq.s32.totalorder %s31, 1
      %p278 = por %p276, %p277
      %p280 = scmp.ne.s32.totalorder %s263, %s279
      %p281 = scmp.eq.s32.totalorder %s31, 0
      %p282 = por %p280, %p281
      %s283 = ssub.s32 %s25, %s32
      %p284 = scmp.eq.s32.totalorder %s283, 0
      %s286 = sadd.s32 %s285, 1
      %s287 = scalar_select %p284, %s285, %s286
      %p290 = pneg %p284
      %p291 = scmp.eq.s32.totalorder %s25, 1
      %p292 = por %p290, %p291
      %p293 = scmp.ne.s32.totalorder %s285, %s288
      %p294 = scmp.eq.s32.totalorder %s25, 0
      %p295 = por %p293, %p294
      %p296 = scmp.ne.s32.totalorder %s285, %s288
      %p297 = scmp.eq.s32.totalorder %s30, 1
      %p298 = por %p296, %p297
      %p299 = scmp.ne.s32.totalorder %s288, %s289
      %p300 = scmp.eq.s32.totalorder %s30, 0
      %p301 = por %p299, %p300
      %p302 = scmp.ne.s32.totalorder %s288, %s289
      %p303 = scmp.eq.s32.totalorder %s31, 1
      %p304 = por %p302, %p303
      %p306 = scmp.ne.s32.totalorder %s289, %s305
      %p307 = scmp.eq.s32.totalorder %s31, 0
      %p308 = por %p306, %p307
      %s309 = ssub.s32 %s25, %s32
      %p310 = scmp.eq.s32.totalorder %s309, 0
      %s312 = sadd.s32 %s311, 1
      %s313 = scalar_select %p310, %s311, %s312
      %p316 = pneg %p310
      %p317 = scmp.eq.s32.totalorder %s25, 1
      %p318 = por %p316, %p317
      %p319 = scmp.ne.s32.totalorder %s311, %s314
      %p320 = scmp.eq.s32.totalorder %s25, 0
      %p321 = por %p319, %p320
      %p322 = scmp.ne.s32.totalorder %s311, %s314
      %p323 = scmp.eq.s32.totalorder %s30, 1
      %p324 = por %p322, %p323
      %p325 = scmp.ne.s32.totalorder %s314, %s315
      %p326 = scmp.eq.s32.totalorder %s30, 0
      %p327 = por %p325, %p326
      %p328 = scmp.ne.s32.totalorder %s314, %s315
      %p329 = scmp.eq.s32.totalorder %s31, 1
      %p330 = por %p328, %p329
      %p332 = scmp.ne.s32.totalorder %s315, %s331
      %p333 = scmp.eq.s32.totalorder %s31, 0
      %p334 = por %p332, %p333
      %s335 = ssub.s32 %s25, %s32
      %p336 = scmp.eq.s32.totalorder %s335, 0
      %s338 = sadd.s32 %s337, 1
      %s339 = scalar_select %p336, %s337, %s338
      %p342 = pneg %p336
      %p343 = scmp.eq.s32.totalorder %s25, 1
      %p344 = por %p342, %p343
      %p345 = scmp.ne.s32.totalorder %s337, %s340
      %p346 = scmp.eq.s32.totalorder %s25, 0
      %p347 = por %p345, %p346
      %p348 = scmp.ne.s32.totalorder %s337, %s340
      %p349 = scmp.eq.s32.totalorder %s30, 1
      %p350 = por %p348, %p349
      %p351 = scmp.ne.s32.totalorder %s340, %s341
      %p352 = scmp.eq.s32.totalorder %s30, 0
      %p353 = por %p351, %p352
      %p354 = scmp.ne.s32.totalorder %s340, %s341
      %p355 = scmp.eq.s32.totalorder %s31, 1
      %p356 = por %p354, %p355
      %p358 = scmp.ne.s32.totalorder %s341, %s357
      %p359 = scmp.eq.s32.totalorder %s31, 0
      %p360 = por %p358, %p359
      %s361 = ssub.s32 %s25, %s32
      %p362 = scmp.eq.s32.totalorder %s361, 0
      %s364 = sadd.s32 %s363, 1
      %s365 = scalar_select %p362, %s363, %s364
      %p368 = pneg %p362
      %p369 = scmp.eq.s32.totalorder %s25, 1
      %p370 = por %p368, %p369
      %p371 = scmp.ne.s32.totalorder %s363, %s366
      %p372 = scmp.eq.s32.totalorder %s25, 0
      %p373 = por %p371, %p372
      %p374 = scmp.ne.s32.totalorder %s363, %s366
      %p375 = scmp.eq.s32.totalorder %s30, 1
      %p376 = por %p374, %p375
      %p377 = scmp.ne.s32.totalorder %s366, %s367
      %p378 = scmp.eq.s32.totalorder %s30, 0
      %p379 = por %p377, %p378
      %p380 = scmp.ne.s32.totalorder %s366, %s367
      %p381 = scmp.eq.s32.totalorder %s31, 1
      %p382 = por %p380, %p381
      %p384 = scmp.ne.s32.totalorder %s367, %s383
      %p385 = scmp.eq.s32.totalorder %s31, 0
      %p386 = por %p384, %p385
      %s387 = ssub.s32 %s25, %s32
      %p388 = scmp.eq.s32.totalorder %s387, 0
      %s390 = sadd.s32 %s389, 1
      %s391 = scalar_select %p388, %s389, %s390
      %p394 = pneg %p388
      %p395 = scmp.eq.s32.totalorder %s25, 1
      %p396 = por %p394, %p395
      %p397 = scmp.ne.s32.totalorder %s389, %s392
      %p398 = scmp.eq.s32.totalorder %s25, 0
      %p399 = por %p397, %p398
      %p400 = scmp.ne.s32.totalorder %s389, %s392
      %p401 = scmp.eq.s32.totalorder %s30, 1
      %p402 = por %p400, %p401
      %p403 = scmp.ne.s32.totalorder %s392, %s393
      %p404 = scmp.eq.s32.totalorder %s30, 0
      %p405 = por %p403, %p404
      %p406 = scmp.ne.s32.totalorder %s392, %s393
      %p407 = scmp.eq.s32.totalorder %s31, 1
      %p408 = por %p406, %p407
      %p410 = scmp.ne.s32.totalorder %s393, %s409
      %p411 = scmp.eq.s32.totalorder %s31, 0
      %p412 = por %p410, %p411
      %p413 = scmp.le.s32.totalorder 1, %s25
      %p414 = scmp.lt.s32.totalorder %s25, 3
      %p415 = pnand %p413, %p414
      %p416 = pneg %p415
      // Predicated region
      $region9: #{tpu_custom_call.1} parent=5 // pred_check
        _
      $region10: #{tpu_custom_call.1} parent=5 // pred_check_branch
        %418 = sbr.rel (%p415) target = $region12
      $region11: #{tpu_custom_call.1} parent=5 // pred_region
        %s419 = ssub.s32 %s25, 1
        // Predicated region
        $region13: #{tpu_custom_call.1} parent=11 // pred_check
          %p420 = pneg %p46
        $region14: #{tpu_custom_call.1} parent=11 // pred_check_branch
          %422 = sbr.rel (%p420) target = $region16
        $region15: #{tpu_custom_call.1} parent=11 // pred_region
          %s424 = ssub.s32 256, 256
          %425 = vsyncadd [#allocation4], %s424
          %s426 = sshll.u32 [#allocation3], 4
          %s427 = int_to_ptr.vmem [resolvable:$true] %s426
          %432 = dma.hbm_to_vmem [thread:$0]  %s0, 256, %s427, [#allocation4], 128, 128, 8
        $region16: #{tpu_custom_call.1} parent=11 // pred_fallthru
          _
        // Predicated region
        $region17: #{tpu_custom_call.1} parent=11 // pred_check
          %p433 = pneg %p67
        $region18: #{tpu_custom_call.1} parent=11 // pred_check_branch
          %435 = sbr.rel (%p433) target = $region20
        $region19: #{tpu_custom_call.1} parent=11 // pred_region
          %s437 = ssub.s32 32, 32
          %438 = vsyncadd [#allocation7], %s437
          %s439 = sshll.u32 [#allocation6], 4
          %s440 = int_to_ptr.vmem [resolvable:$true] %s439
          %445 = dma.hbm_to_vmem [thread:$0]  %s1, 32, %s440, [#allocation7], 16, 16, 1
        $region20: #{tpu_custom_call.1} parent=11 // pred_fallthru
          _
      $region12: #{tpu_custom_call.1} parent=5 // pred_fallthru
        _
      %p446 = scmp.lt.s32.totalorder %s25, 2
      // Predicated region
      $region21: #{tpu_custom_call.1} parent=5 // pred_check
        %p447 = pneg %p446
      $region22: #{tpu_custom_call.1} parent=5 // pred_check_branch
        %449 = sbr.rel (%p447) target = $region24
      $region23: #{tpu_custom_call.1} parent=5 // pred_region
        // Predicated region
        $region25: #{tpu_custom_call.1} parent=23 // pred_check
          %p450 = pneg %p87
        $region26: #{tpu_custom_call.1} parent=23 // pred_check_branch
          %452 = sbr.rel (%p450) target = $region28
        $region27: #{tpu_custom_call.1} parent=23 // pred_region
          %p453 = scmp.lt.s32.totalorder %s25, 1
          %s454 = scalar_select %p453, %s25, 1
          %s455 = smul.addr %s454, 4
          %s456 = smul.addr %s455, 4
          %s457 = scalar_lea.vmem %s2, %s456
        $region28: #{tpu_custom_call.1} parent=23 // pred_fallthru
          _
        // Predicated region
        $region29: #{tpu_custom_call.1} parent=23 // pred_check
          %p458 = pneg %p113
        $region30: #{tpu_custom_call.1} parent=23 // pred_check_branch
          %460 = sbr.rel (%p458) target = $region32
        $region31: #{tpu_custom_call.1} parent=23 // pred_region
          %p461 = scmp.lt.s32.totalorder %s25, 1
          %s462 = scalar_select %p461, %s25, 1
          %s463 = scalar_lea.vmem %s3, %s462
        $region32: #{tpu_custom_call.1} parent=23 // pred_fallthru
          _
        // Predicated region
        $region33: #{tpu_custom_call.1} parent=23 // pred_check
          %p464 = pneg %p139
        $region34: #{tpu_custom_call.1} parent=23 // pred_check_branch
          %466 = sbr.rel (%p464) target = $region36
        $region35: #{tpu_custom_call.1} parent=23 // pred_region
          %p467 = scmp.lt.s32.totalorder %s25, 1
          %s468 = scalar_select %p467, %s25, 1
          %s469 = smul.addr %s468, 4
          %s470 = smul.addr %s469, 4
          %s471 = scalar_lea.vmem %s4, %s470
        $region36: #{tpu_custom_call.1} parent=23 // pred_fallthru
          _
        // Predicated region
        $region37: #{tpu_custom_call.1} parent=23 // pred_check
          %p472 = pneg %p165
        $region38: #{tpu_custom_call.1} parent=23 // pred_check_branch
          %474 = sbr.rel (%p472) target = $region40
        $region39: #{tpu_custom_call.1} parent=23 // pred_region
          %p475 = scmp.lt.s32.totalorder %s25, 1
          %s476 = scalar_select %p475, %s25, 1
          %s477 = scalar_lea.vmem %s5, %s476
        $region40: #{tpu_custom_call.1} parent=23 // pred_fallthru
          _
        // Predicated region
        $region41: #{tpu_custom_call.1} parent=23 // pred_check
          %p478 = pneg %p191
        $region42: #{tpu_custom_call.1} parent=23 // pred_check_branch
          %480 = sbr.rel (%p478) target = $region44
        $region43: #{tpu_custom_call.1} parent=23 // pred_region
          %p481 = scmp.lt.s32.totalorder %s25, 1
          %s482 = scalar_select %p481, %s25, 1
          %s483 = scalar_lea.vmem %s6, %s482
        $region44: #{tpu_custom_call.1} parent=23 // pred_fallthru
          _
        // Predicated region
        $region45: #{tpu_custom_call.1} parent=23 // pred_check
          %p484 = pneg %p217
        $region46: #{tpu_custom_call.1} parent=23 // pred_check_branch
          %486 = sbr.rel (%p484) target = $region48
        $region47: #{tpu_custom_call.1} parent=23 // pred_region
          %p487 = scmp.lt.s32.totalorder %s25, 1
          %s488 = scalar_select %p487, %s25, 1
          %s489 = scalar_lea.vmem %s7, %s488
        $region48: #{tpu_custom_call.1} parent=23 // pred_fallthru
          _
        // Predicated region
        $region49: #{tpu_custom_call.1} parent=23 // pred_check
          %p490 = pneg %p243
        $region50: #{tpu_custom_call.1} parent=23 // pred_check_branch
          %492 = sbr.rel (%p490) target = $region52
        $region51: #{tpu_custom_call.1} parent=23 // pred_region
          %p493 = scmp.lt.s32.totalorder %s25, 1
          %s494 = scalar_select %p493, %s25, 1
          %s495 = smul.addr %s494, 4
          %s496 = smul.addr %s495, 4
          %s497 = scalar_lea.vmem %s8, %s496
        $region52: #{tpu_custom_call.1} parent=23 // pred_fallthru
          _
        // Predicated region
        $region53: #{tpu_custom_call.1} parent=23 // pred_check
          %p498 = pneg %p269
        $region54: #{tpu_custom_call.1} parent=23 // pred_check_branch
          %500 = sbr.rel (%p498) target = $region56
        $region55: #{tpu_custom_call.1} parent=23 // pred_region
          %p501 = scmp.lt.s32.totalorder %s25, 1
          %s502 = scalar_select %p501, %s25, 1
          %s503 = scalar_lea.vmem %s9, %s502
        $region56: #{tpu_custom_call.1} parent=23 // pred_fallthru
          _
        // Predicated region
        $region57: #{tpu_custom_call.1} parent=23 // pred_check
          %p504 = pneg %p295
        $region58: #{tpu_custom_call.1} parent=23 // pred_check_branch
          %506 = sbr.rel (%p504) target = $region60
        $region59: #{tpu_custom_call.1} parent=23 // pred_region
          %p507 = scmp.lt.s32.totalorder %s25, 1
          %s508 = scalar_select %p507, %s25, 1
          %s509 = smul.addr %s508, 8
          %s510 = smul.addr %s509, 4
          %s511 = scalar_lea.vmem %s10, %s510
        $region60: #{tpu_custom_call.1} parent=23 // pred_fallthru
          _
        // Predicated region
        $region61: #{tpu_custom_call.1} parent=23 // pred_check
          %p512 = pneg %p321
        $region62: #{tpu_custom_call.1} parent=23 // pred_check_branch
          %514 = sbr.rel (%p512) target = $region64
        $region63: #{tpu_custom_call.1} parent=23 // pred_region
          %p515 = scmp.lt.s32.totalorder %s25, 1
          %s516 = scalar_select %p515, %s25, 1
          %s517 = scalar_lea.vmem %s11, %s516
        $region64: #{tpu_custom_call.1} parent=23 // pred_fallthru
          _
        // Predicated region
        $region65: #{tpu_custom_call.1} parent=23 // pred_check
          %p518 = pneg %p347
        $region66: #{tpu_custom_call.1} parent=23 // pred_check_branch
          %520 = sbr.rel (%p518) target = $region68
        $region67: #{tpu_custom_call.1} parent=23 // pred_region
          %p521 = scmp.lt.s32.totalorder %s25, 1
          %s522 = scalar_select %p521, %s25, 1
          %s523 = scalar_lea.vmem %s12, %s522
        $region68: #{tpu_custom_call.1} parent=23 // pred_fallthru
          _
        // Predicated region
        $region69: #{tpu_custom_call.1} parent=23 // pred_check
          %p524 = pneg %p373
        $region70: #{tpu_custom_call.1} parent=23 // pred_check_branch
          %526 = sbr.rel (%p524) target = $region72
        $region71: #{tpu_custom_call.1} parent=23 // pred_region
          %p527 = scmp.lt.s32.totalorder %s25, 1
          %s528 = scalar_select %p527, %s25, 1
          %s529 = scalar_lea.vmem %s13, %s528
        $region72: #{tpu_custom_call.1} parent=23 // pred_fallthru
          _
      $region24: #{tpu_custom_call.1} parent=5 // pred_fallthru
        _
      %p530 = scmp.le.s32.totalorder 1, %s25
      %p531 = scmp.lt.s32.totalorder %s25, 3
      %p532 = pnand %p530, %p531
      %p533 = pneg %p532
      // Predicated region
      $region73: #{tpu_custom_call.1} parent=5 // pred_check
        _
      $region74: #{tpu_custom_call.1} parent=5 // pred_check_branch
        %535 = sbr.rel (%p532) target = $region76
      $region75: #{tpu_custom_call.1} parent=5 // pred_region
        %s536 = ssub.s32 %s25, 1
        // Predicated region
        $region77: #{tpu_custom_call.1} parent=75 // pred_check
          %p537 = pneg %p46
        $region78: #{tpu_custom_call.1} parent=75 // pred_check_branch
          %539 = sbr.rel (%p537) target = $region80
        $region79: #{tpu_custom_call.1} parent=75 // pred_region
          %540 = dma.done [#allocation4], 256
        $region80: #{tpu_custom_call.1} parent=75 // pred_fallthru
          _
        // Predicated region
        $region81: #{tpu_custom_call.1} parent=75 // pred_check
          %p541 = pneg %p67
        $region82: #{tpu_custom_call.1} parent=75 // pred_check_branch
          %543 = sbr.rel (%p541) target = $region84
        $region83: #{tpu_custom_call.1} parent=75 // pred_region
          %544 = dma.done [#allocation7], 32
        $region84: #{tpu_custom_call.1} parent=75 // pred_fallthru
          _
        %p545 = pneg %p46
        %p546 = pneg %p43
        %p547 = pneg %p67
        %p548 = pneg %p64
        %p549 = scmp.lt.s32.totalorder %s30, 1
        %s550 = scalar_select %p549, %s30, 1
        %s551 = smul.addr %s550, 4
        %s552 = smul.addr %s551, 4
        %s553 = scalar_lea.vmem %s2, %s552
        %p554 = pneg %p93
        %p555 = pneg %p90
        %p556 = scmp.lt.s32.totalorder %s30, 1
        %s557 = scalar_select %p556, %s30, 1
        %s558 = scalar_lea.vmem %s3, %s557
        %p559 = pneg %p119
        %p560 = pneg %p116
        %p561 = scmp.lt.s32.totalorder %s30, 1
        %s562 = scalar_select %p561, %s30, 1
        %s563 = smul.addr %s562, 4
        %s564 = smul.addr %s563, 4
        %s565 = scalar_lea.vmem %s4, %s564
        %p566 = pneg %p145
        %p567 = pneg %p142
        %p568 = scmp.lt.s32.totalorder %s30, 1
        %s569 = scalar_select %p568, %s30, 1
        %s570 = scalar_lea.vmem %s5, %s569
        %p571 = pneg %p171
        %p572 = pneg %p168
        %p573 = scmp.lt.s32.totalorder %s30, 1
        %s574 = scalar_select %p573, %s30, 1
        %s575 = scalar_lea.vmem %s6, %s574
        %p576 = pneg %p197
        %p577 = pneg %p194
        %p578 = scmp.lt.s32.totalorder %s30, 1
        %s579 = scalar_select %p578, %s30, 1
        %s580 = scalar_lea.vmem %s7, %s579
        %p581 = pneg %p223
        %p582 = pneg %p220
        %p583 = scmp.lt.s32.totalorder %s30, 1
        %s584 = scalar_select %p583, %s30, 1
        %s585 = smul.addr %s584, 4
        %s586 = smul.addr %s585, 4
        %s587 = scalar_lea.vmem %s8, %s586
        %p588 = pneg %p249
        %p589 = pneg %p246
        %p590 = scmp.lt.s32.totalorder %s30, 1
        %s591 = scalar_select %p590, %s30, 1
        %s592 = scalar_lea.vmem %s9, %s591
        %p593 = pneg %p275
        %p594 = pneg %p272
        %p595 = scmp.lt.s32.totalorder %s30, 1
        %s596 = scalar_select %p595, %s30, 1
        %s597 = smul.addr %s596, 8
        %s598 = smul.addr %s597, 4
        %s599 = scalar_lea.vmem %s10, %s598
        %p600 = pneg %p301
        %p601 = pneg %p298
        %p602 = scmp.lt.s32.totalorder %s30, 1
        %s603 = scalar_select %p602, %s30, 1
        %s604 = scalar_lea.vmem %s11, %s603
        %p605 = pneg %p327
        %p606 = pneg %p324
        %p607 = scmp.lt.s32.totalorder %s30, 1
        %s608 = scalar_select %p607, %s30, 1
        %s609 = scalar_lea.vmem %s12, %s608
        %p610 = pneg %p353
        %p611 = pneg %p350
        %p612 = scmp.lt.s32.totalorder %s30, 1
        %s613 = scalar_select %p612, %s30, 1
        %s614 = scalar_lea.vmem %s13, %s613
        %p615 = pneg %p379
        %p616 = pneg %p376
        %p617 = pneg %p405
        %p618 = pneg %p402
        %s619 = sand.u32 %s392, 1
        %s620 = scalar_lea.sflag [#allocation5], %s619
        %s621 = sand.u32 %s392, 1
        %s622 = smul.addr %s621, 16
        %s623 = scalar_lea.vmem [#allocation8], %s622
        %p624 = scmp.lt.s32.totalorder %s30, 1
        %s625 = scalar_select %p624, %s30, 1
        %s626 = smul.addr %s625, 4
        %s627 = smul.addr %s626, 4
        %s628 = scalar_lea.vmem %s2, %s627
        %p629 = scmp.lt.s32.totalorder %s30, 1
        %s630 = scalar_select %p629, %s30, 1
        %s631 = scalar_lea.vmem %s3, %s630
        %p632 = scmp.lt.s32.totalorder %s30, 1
        %s633 = scalar_select %p632, %s30, 1
        %s634 = smul.addr %s633, 4
        %s635 = smul.addr %s634, 4
        %s636 = scalar_lea.vmem %s4, %s635
        %p637 = scmp.lt.s32.totalorder %s30, 1
        %s638 = scalar_select %p637, %s30, 1
        %s639 = scalar_lea.vmem %s5, %s638
        %p640 = scmp.lt.s32.totalorder %s30, 1
        %s641 = scalar_select %p640, %s30, 1
        %s642 = scalar_lea.vmem %s6, %s641
        %p643 = scmp.lt.s32.totalorder %s30, 1
        %s644 = scalar_select %p643, %s30, 1
        %s645 = scalar_lea.vmem %s7, %s644
        %p646 = scmp.lt.s32.totalorder %s30, 1
        %s647 = scalar_select %p646, %s30, 1
        %s648 = smul.addr %s647, 4
        %s649 = smul.addr %s648, 4
        %s650 = scalar_lea.vmem %s8, %s649
        %p651 = scmp.lt.s32.totalorder %s30, 1
        %s652 = scalar_select %p651, %s30, 1
        %s653 = scalar_lea.vmem %s9, %s652
        %p654 = scmp.lt.s32.totalorder %s30, 1
        %s655 = scalar_select %p654, %s30, 1
        %s656 = smul.addr %s655, 8
        %s657 = smul.addr %s656, 4
        %s658 = scalar_lea.vmem %s10, %s657
        %p659 = scmp.lt.s32.totalorder %s30, 1
        %s660 = scalar_select %p659, %s30, 1
        %s661 = scalar_lea.vmem %s11, %s660
        %p662 = scmp.lt.s32.totalorder %s30, 1
        %s663 = scalar_select %p662, %s30, 1
        %s664 = scalar_lea.vmem %s12, %s663
        %p665 = scmp.lt.s32.totalorder %s30, 1
        %s666 = scalar_select %p665, %s30, 1
        %s667 = scalar_lea.vmem %s13, %s666
        %p669 = scmp.eq.s32.totalorder %s30, 0
        // Predicated region
        $region85: #{tpu_custom_call.1} parent=75 // pred_check
          %p670 = pneg %p669
        $region86: #{tpu_custom_call.1} parent=75 // pred_check_branch
          %672 = sbr.rel (%p670) target = $region88
        $region87: #{tpu_custom_call.1} parent=75 // pred_region
          %v673 = vld [vmem:[#allocation3] sm:$0xff]
          %v674 = vld [vmem:[#allocation3 + $0x8] sm:$0xff]
          %vm675 = vcmask 261120
          %676 = vst.msk [vmem:[#allocation2] sm:$0xff] %vm675, %v673
          %677 = vst.msk [vmem:[#allocation2 + $0x8] sm:$0xff] %vm675, %v674
        $region88: #{tpu_custom_call.1} parent=75 // pred_fallthru
          _
        %v678 = vld [vmem:[#allocation2] sm:$0xff]
        %v679 = vld [vmem:[#allocation2 + $0x8] sm:$0xff]
        %v680 = vpack.c.bf16 %v679, %v678
        %v681 = vld [vmem:[%s628] sm:$0xf]
        %v682 = vld [vmem:[%s628 + $0x4] sm:$0xf]
        %v683 = vld [vmem:[%s628 + $0x8] sm:$0xf]
        %v684 = vld [vmem:[%s628 + $0xc] sm:$0xf]
        %v685 = vld [vmem:[%s631] sm:$0x1]
        %v687 = vlaneseq
        %v688 = vshrl.u32 %v687, 7
        %v689 = vsub.s32 0, %v688
        %v690 = vrot.slane %v685, %v689
        %v696 = vunpack.c.l.b16 %v681
        %v697 = vunpack.c.l.b16 %v682
        %v698 = vunpack.c.l.b16 %v683
        %v699 = vunpack.c.l.b16 %v684
        %v700 = vpack.c.b16 %v697, %v696
        %v701 = vpack.c.b16 %v699, %v698
        %vm704 = vcmask 261120
        %v706 = vsel %vm704, %v680, 0
        %708 = vmatprep.subr.bf16.mxu0 0
        %709 = vmatpush1.bf16.msra.mxu0 0
        %710 = vmatprep.subr.bf16.mxu0 0
        %711 = vmatpush1.bf16.msra.mxu0 0
        %712 = vmatprep.subr.bf16.mxu0 0
        %713 = vmatpush1.bf16.msra.mxu0 0
        %714 = vmatprep.subr.bf16.mxu0 0
        %715 = vmatpush1.bf16.msra.mxu0 0
        %716 = vmatprep.subr.bf16.mxu0 0
        %717 = vmatpush1.bf16.msra.mxu0 0
        %718 = vmatprep.subr.bf16.mxu0 0
        %719 = vmatpush1.bf16.msra.mxu0 0
        %720 = vmatprep.subr.bf16.mxu0 0
        %721 = vmatpush1.bf16.msra.mxu0 %v701
        %722 = vmatprep.subr.bf16.mxu0 0
        %723 = vmatpush1.bf16.msra.mxu0 %v700
        %724 = vmatprep.subr.bf16.mxu0 0
        %725 = vmatpush2.bf16.msra.mxu0 0
        %726 = vmatprep.subr.bf16.mxu0 0
        %727 = vmatpush2.bf16.msra.mxu0 0
        %728 = vmatprep.subr.bf16.mxu0 0
        %729 = vmatpush2.bf16.msra.mxu0 0
        %730 = vmatprep.subr.bf16.mxu0 0
        %731 = vmatpush2.bf16.msra.mxu0 0
        %732 = vmatprep.subr.bf16.mxu0 0
        %733 = vmatpush2.bf16.msra.mxu0 0
        %734 = vmatprep.subr.bf16.mxu0 0
        %735 = vmatpush2.bf16.msra.mxu0 0
        %736 = vmatprep.subr.bf16.mxu0 0
        %737 = vmatpush2.bf16.msra.mxu0 0
        %738 = vmatprep.subr.bf16.mxu0 0
        %739 = vmatpush2.bf16.msra.mxu0 0
        %740 = vmatprep.mubr.bf16.mxu0 0
        %741 = vmatmul.mubr.bf16.gmra.mxu0 %v706
        %v742 = vpop.f32.mrf.mxu0
        %v743 = vadd.f32 %v690, %v742
        %v744 = vpop.f32.mrf.mxu0
        %v745 = vpop.f32.mrf.mxu0
        %v746 = vadd.f32 %v690, %v745
        %v747 = vpop.f32.mrf.mxu0
        %748 = vdwg.mxu0
        %751 = vrot.lane.b32.xlu0 %v743, 120
        %v752 = vpop.permute.xlu0 %751
        %753 = vrot.lane.b32.xlu0 %v746, 120
        %v754 = vpop.permute.xlu0 %753
        %757 = vrot.lane.b32.xlu0 %v743, 112
        %v758 = vpop.permute.xlu0 %757
        %759 = vrot.lane.b32.xlu0 %v746, 112
        %v760 = vpop.permute.xlu0 %759
        %763 = vrot.lane.b32.xlu0 %v743, 104
        %v764 = vpop.permute.xlu0 %763
        %765 = vrot.lane.b32.xlu0 %v746, 104
        %v766 = vpop.permute.xlu0 %765
        %v769 = vpack.c.bf16 %v743, %v743
        %v770 = vpack.c.bf16 %v752, %v752
        %v771 = vpack.c.bf16 %v758, %v758
        %v772 = vpack.c.bf16 %v764, %v764
        %v773 = vpack.c.bf16 %v746, %v746
        %v774 = vpack.c.bf16 %v754, %v754
        %v775 = vpack.c.bf16 %v760, %v760
        %v776 = vpack.c.bf16 %v766, %v766
        %778 = vrot.lane.b32.xlu0 %v769, 96
        %v779 = vpop.permute.xlu0 %778
        %vm780 = vcmask 64512
        %v782 = vsel %vm780, %v769, 0
        %v785 = vsel %vm780, %v779, 0
        %787 = vmatprep.subr.bf16.mxu0 0
        %788 = vmatpush1.bf16.xpose.msra.mxu0 0
        %789 = vmatprep.subr.bf16.mxu0 0
        %790 = vmatpush1.bf16.xpose.msra.mxu0 0
        %791 = vmatprep.subr.bf16.mxu0 0
        %792 = vmatpush1.bf16.xpose.msra.mxu0 0
        %793 = vmatprep.subr.bf16.mxu0 0
        %794 = vmatpush1.bf16.xpose.msra.mxu0 0
        %795 = vmatprep.subr.bf16.mxu0 0
        %796 = vmatpush1.bf16.xpose.msra.mxu0 0
        %797 = vmatprep.subr.bf16.mxu0 0
        %798 = vmatpush1.bf16.xpose.msra.mxu0 0
        %799 = vmatprep.subr.bf16.mxu0 0
        %800 = vmatpush1.bf16.xpose.msra.mxu0 0
        %801 = vmatprep.subr.bf16.mxu0 0
        %802 = vmatpush1.bf16.xpose.msra.mxu0 %v785
        %803 = vmatprep.subr.bf16.mxu0 0
        %804 = vmatpush2.bf16.xpose.msra.mxu0 0
        %805 = vmatprep.subr.bf16.mxu0 0
        %806 = vmatpush2.bf16.xpose.msra.mxu0 0
        %807 = vmatprep.subr.bf16.mxu0 0
        %808 = vmatpush2.bf16.xpose.msra.mxu0 0
        %809 = vmatprep.subr.bf16.mxu0 0
        %810 = vmatpush2.bf16.xpose.msra.mxu0 0
        %811 = vmatprep.subr.bf16.mxu0 0
        %812 = vmatpush2.bf16.xpose.msra.mxu0 0
        %813 = vmatprep.subr.bf16.mxu0 0
        %814 = vmatpush2.bf16.xpose.msra.mxu0 0
        %815 = vmatprep.subr.bf16.mxu0 0
        %816 = vmatpush2.bf16.xpose.msra.mxu0 0
        %817 = vmatprep.subr.bf16.mxu0 0
        %818 = vmatpush2.bf16.xpose.msra.mxu0 0
        %819 = vmatprep.mubr.bf16.mxu0 0
        %820 = vmatmul.mubr.bf16.gmra.mxu0 %v782
        %v821 = vpop.f32.mrf.mxu0
        %v822 = vadd.f32 0.0, %v821
        %v823 = vpop.f32.mrf.mxu0
        %v824 = vpop.f32.mrf.mxu0
        %v825 = vpop.f32.mrf.mxu0
        %826 = vdwg.mxu0
        %828 = vrot.lane.b32.xlu0 %v770, 96
        %v829 = vpop.permute.xlu0 %828
        %v831 = vsel %vm780, %v770, 0
        %v834 = vsel %vm780, %v829, 0
        %836 = vmatprep.subr.bf16.mxu0 0
        %837 = vmatpush1.bf16.xpose.msra.mxu0 0
        %838 = vmatprep.subr.bf16.mxu0 0
        %839 = vmatpush1.bf16.xpose.msra.mxu0 0
        %840 = vmatprep.subr.bf16.mxu0 0
        %841 = vmatpush1.bf16.xpose.msra.mxu0 0
        %842 = vmatprep.subr.bf16.mxu0 0
        %843 = vmatpush1.bf16.xpose.msra.mxu0 0
        %844 = vmatprep.subr.bf16.mxu0 0
        %845 = vmatpush1.bf16.xpose.msra.mxu0 0
        %846 = vmatprep.subr.bf16.mxu0 0
        %847 = vmatpush1.bf16.xpose.msra.mxu0 0
        %848 = vmatprep.subr.bf16.mxu0 0
        %849 = vmatpush1.bf16.xpose.msra.mxu0 0
        %850 = vmatprep.subr.bf16.mxu0 0
        %851 = vmatpush1.bf16.xpose.msra.mxu0 %v834
        %852 = vmatprep.subr.bf16.mxu0 0
        %853 = vmatpush2.bf16.xpose.msra.mxu0 0
        %854 = vmatprep.subr.bf16.mxu0 0
        %855 = vmatpush2.bf16.xpose.msra.mxu0 0
        %856 = vmatprep.subr.bf16.mxu0 0
        %857 = vmatpush2.bf16.xpose.msra.mxu0 0
        %858 = vmatprep.subr.bf16.mxu0 0
        %859 = vmatpush2.bf16.xpose.msra.mxu0 0
        %860 = vmatprep.subr.bf16.mxu0 0
        %861 = vmatpush2.bf16.xpose.msra.mxu0 0
        %862 = vmatprep.subr.bf16.mxu0 0
        %863 = vmatpush2.bf16.xpose.msra.mxu0 0
        %864 = vmatprep.subr.bf16.mxu0 0
        %865 = vmatpush2.bf16.xpose.msra.mxu0 0
        %866 = vmatprep.subr.bf16.mxu0 0
        %867 = vmatpush2.bf16.xpose.msra.mxu0 0
        %868 = vmatprep.mubr.bf16.mxu0 0
        %869 = vmatmul.mubr.bf16.gmra.mxu0 %v831
        %v870 = vpop.f32.mrf.mxu0
        %v871 = vadd.f32 0.0, %v870
        %v872 = vpop.f32.mrf.mxu0
        %v873 = vpop.f32.mrf.mxu0
        %v874 = vpop.f32.mrf.mxu0
        %875 = vdwg.mxu0
        %877 = vrot.lane.b32.xlu0 %v771, 96
        %v878 = vpop.permute.xlu0 %877
        %v880 = vsel %vm780, %v771, 0
        %v883 = vsel %vm780, %v878, 0
        %885 = vmatprep.subr.bf16.mxu0 0
        %886 = vmatpush1.bf16.xpose.msra.mxu0 0
        %887 = vmatprep.subr.bf16.mxu0 0
        %888 = vmatpush1.bf16.xpose.msra.mxu0 0
        %889 = vmatprep.subr.bf16.mxu0 0
        %890 = vmatpush1.bf16.xpose.msra.mxu0 0
        %891 = vmatprep.subr.bf16.mxu0 0
        %892 = vmatpush1.bf16.xpose.msra.mxu0 0
        %893 = vmatprep.subr.bf16.mxu0 0
        %894 = vmatpush1.bf16.xpose.msra.mxu0 0
        %895 = vmatprep.subr.bf16.mxu0 0
        %896 = vmatpush1.bf16.xpose.msra.mxu0 0
        %897 = vmatprep.subr.bf16.mxu0 0
        %898 = vmatpush1.bf16.xpose.msra.mxu0 0
        %899 = vmatprep.subr.bf16.mxu0 0
        %900 = vmatpush1.bf16.xpose.msra.mxu0 %v883
        %901 = vmatprep.subr.bf16.mxu0 0
        %902 = vmatpush2.bf16.xpose.msra.mxu0 0
        %903 = vmatprep.subr.bf16.mxu0 0
        %904 = vmatpush2.bf16.xpose.msra.mxu0 0
        %905 = vmatprep.subr.bf16.mxu0 0
        %906 = vmatpush2.bf16.xpose.msra.mxu0 0
        %907 = vmatprep.subr.bf16.mxu0 0
        %908 = vmatpush2.bf16.xpose.msra.mxu0 0
        %909 = vmatprep.subr.bf16.mxu0 0
        %910 = vmatpush2.bf16.xpose.msra.mxu0 0
        %911 = vmatprep.subr.bf16.mxu0 0
        %912 = vmatpush2.bf16.xpose.msra.mxu0 0
        %913 = vmatprep.subr.bf16.mxu0 0
        %914 = vmatpush2.bf16.xpose.msra.mxu0 0
        %915 = vmatprep.subr.bf16.mxu0 0
        %916 = vmatpush2.bf16.xpose.msra.mxu0 0
        %917 = vmatprep.mubr.bf16.mxu0 0
        %918 = vmatmul.mubr.bf16.gmra.mxu0 %v880
        %v919 = vpop.f32.mrf.mxu0
        %v920 = vadd.f32 0.0, %v919
        %v921 = vpop.f32.mrf.mxu0
        %v922 = vpop.f32.mrf.mxu0
        %v923 = vpop.f32.mrf.mxu0
        %924 = vdwg.mxu0
        %926 = vrot.lane.b32.xlu0 %v772, 96
        %v927 = vpop.permute.xlu0 %926
        %v929 = vsel %vm780, %v772, 0
        %v932 = vsel %vm780, %v927, 0
        %934 = vmatprep.subr.bf16.mxu0 0
        %935 = vmatpush1.bf16.xpose.msra.mxu0 0
        %936 = vmatprep.subr.bf16.mxu0 0
        %937 = vmatpush1.bf16.xpose.msra.mxu0 0
        %938 = vmatprep.subr.bf16.mxu0 0
        %939 = vmatpush1.bf16.xpose.msra.mxu0 0
        %940 = vmatprep.subr.bf16.mxu0 0
        %941 = vmatpush1.bf16.xpose.msra.mxu0 0
        %942 = vmatprep.subr.bf16.mxu0 0
        %943 = vmatpush1.bf16.xpose.msra.mxu0 0
        %944 = vmatprep.subr.bf16.mxu0 0
        %945 = vmatpush1.bf16.xpose.msra.mxu0 0
        %946 = vmatprep.subr.bf16.mxu0 0
        %947 = vmatpush1.bf16.xpose.msra.mxu0 0
        %948 = vmatprep.subr.bf16.mxu0 0
        %949 = vmatpush1.bf16.xpose.msra.mxu0 %v932
        %950 = vmatprep.subr.bf16.mxu0 0
        %951 = vmatpush2.bf16.xpose.msra.mxu0 0
        %952 = vmatprep.subr.bf16.mxu0 0
        %953 = vmatpush2.bf16.xpose.msra.mxu0 0
        %954 = vmatprep.subr.bf16.mxu0 0
        %955 = vmatpush2.bf16.xpose.msra.mxu0 0
        %956 = vmatprep.subr.bf16.mxu0 0
        %957 = vmatpush2.bf16.xpose.msra.mxu0 0
        %958 = vmatprep.subr.bf16.mxu0 0
        %959 = vmatpush2.bf16.xpose.msra.mxu0 0
        %960 = vmatprep.subr.bf16.mxu0 0
        %961 = vmatpush2.bf16.xpose.msra.mxu0 0
        %962 = vmatprep.subr.bf16.mxu0 0
        %963 = vmatpush2.bf16.xpose.msra.mxu0 0
        %964 = vmatprep.subr.bf16.mxu0 0
        %965 = vmatpush2.bf16.xpose.msra.mxu0 0
        %966 = vmatprep.mubr.bf16.mxu0 0
        %967 = vmatmul.mubr.bf16.gmra.mxu0 %v929
        %v968 = vpop.f32.mrf.mxu0
        %v969 = vadd.f32 0.0, %v968
        %v970 = vpop.f32.mrf.mxu0
        %v971 = vpop.f32.mrf.mxu0
        %v972 = vpop.f32.mrf.mxu0
        %973 = vdwg.mxu0
        %975 = vrot.lane.b32.xlu0 %v773, 96
        %v976 = vpop.permute.xlu0 %975
        %v978 = vsel %vm780, %v773, 0
        %v981 = vsel %vm780, %v976, 0
        %983 = vmatprep.subr.bf16.mxu0 0
        %984 = vmatpush1.bf16.xpose.msra.mxu0 0
        %985 = vmatprep.subr.bf16.mxu0 0
        %986 = vmatpush1.bf16.xpose.msra.mxu0 0
        %987 = vmatprep.subr.bf16.mxu0 0
        %988 = vmatpush1.bf16.xpose.msra.mxu0 0
        %989 = vmatprep.subr.bf16.mxu0 0
        %990 = vmatpush1.bf16.xpose.msra.mxu0 0
        %991 = vmatprep.subr.bf16.mxu0 0
        %992 = vmatpush1.bf16.xpose.msra.mxu0 0
        %993 = vmatprep.subr.bf16.mxu0 0
        %994 = vmatpush1.bf16.xpose.msra.mxu0 0
        %995 = vmatprep.subr.bf16.mxu0 0
        %996 = vmatpush1.bf16.xpose.msra.mxu0 0
        %997 = vmatprep.subr.bf16.mxu0 0
        %998 = vmatpush1.bf16.xpose.msra.mxu0 %v981
        %999 = vmatprep.subr.bf16.mxu0 0
        %1000 = vmatpush2.bf16.xpose.msra.mxu0 0
        %1001 = vmatprep.subr.bf16.mxu0 0
        %1002 = vmatpush2.bf16.xpose.msra.mxu0 0
        %1003 = vmatprep.subr.bf16.mxu0 0
        %1004 = vmatpush2.bf16.xpose.msra.mxu0 0
        %1005 = vmatprep.subr.bf16.mxu0 0
        %1006 = vmatpush2.bf16.xpose.msra.mxu0 0
        %1007 = vmatprep.subr.bf16.mxu0 0
        %1008 = vmatpush2.bf16.xpose.msra.mxu0 0
        %1009 = vmatprep.subr.bf16.mxu0 0
        %1010 = vmatpush2.bf16.xpose.msra.mxu0 0
        %1011 = vmatprep.subr.bf16.mxu0 0
        %1012 = vmatpush2.bf16.xpose.msra.mxu0 0
        %1013 = vmatprep.subr.bf16.mxu0 0
        %1014 = vmatpush2.bf16.xpose.msra.mxu0 0
        %1015 = vmatprep.mubr.bf16.mxu0 0
        %1016 = vmatmul.mubr.bf16.gmra.mxu0 %v978
        %v1017 = vpop.f32.mrf.mxu0
        %v1018 = vadd.f32 0.0, %v1017
        %v1019 = vpop.f32.mrf.mxu0
        %v1020 = vpop.f32.mrf.mxu0
        %v1021 = vpop.f32.mrf.mxu0
        %1022 = vdwg.mxu0
        %1024 = vrot.lane.b32.xlu0 %v774, 96
        %v1025 = vpop.permute.xlu0 %1024
        %v1027 = vsel %vm780, %v774, 0
        %v1030 = vsel %vm780, %v1025, 0
        %1032 = vmatprep.subr.bf16.mxu0 0
        %1033 = vmatpush1.bf16.xpose.msra.mxu0 0
        %1034 = vmatprep.subr.bf16.mxu0 0
        %1035 = vmatpush1.bf16.xpose.msra.mxu0 0
        %1036 = vmatprep.subr.bf16.mxu0 0
        %1037 = vmatpush1.bf16.xpose.msra.mxu0 0
        %1038 = vmatprep.subr.bf16.mxu0 0
        %1039 = vmatpush1.bf16.xpose.msra.mxu0 0
        %1040 = vmatprep.subr.bf16.mxu0 0
        %1041 = vmatpush1.bf16.xpose.msra.mxu0 0
        %1042 = vmatprep.subr.bf16.mxu0 0
        %1043 = vmatpush1.bf16.xpose.msra.mxu0 0
        %1044 = vmatprep.subr.bf16.mxu0 0
        %1045 = vmatpush1.bf16.xpose.msra.mxu0 0
        %1046 = vmatprep.subr.bf16.mxu0 0
        %1047 = vmatpush1.bf16.xpose.msra.mxu0 %v1030
        %1048 = vmatprep.subr.bf16.mxu0 0
        %1049 = vmatpush2.bf16.xpose.msra.mxu0 0
        %1050 = vmatprep.subr.bf16.mxu0 0
        %1051 = vmatpush2.bf16.xpose.msra.mxu0 0
        %1052 = vmatprep.subr.bf16.mxu0 0
        %1053 = vmatpush2.bf16.xpose.msra.mxu0 0
        %1054 = vmatprep.subr.bf16.mxu0 0
        %1055 = vmatpush2.bf16.xpose.msra.mxu0 0
        %1056 = vmatprep.subr.bf16.mxu0 0
        %1057 = vmatpush2.bf16.xpose.msra.mxu0 0
        %1058 = vmatprep.subr.bf16.mxu0 0
        %1059 = vmatpush2.bf16.xpose.msra.mxu0 0
        %1060 = vmatprep.subr.bf16.mxu0 0
        %1061 = vmatpush2.bf16.xpose.msra.mxu0 0
        %1062 = vmatprep.subr.bf16.mxu0 0
        %1063 = vmatpush2.bf16.xpose.msra.mxu0 0
        %1064 = vmatprep.mubr.bf16.mxu0 0
        %1065 = vmatmul.mubr.bf16.gmra.mxu0 %v1027
        %v1066 = vpop.f32.mrf.mxu0
        %v1067 = vadd.f32 0.0, %v1066
        %v1068 = vpop.f32.mrf.mxu0
        %v1069 = vpop.f32.mrf.mxu0
        %v1070 = vpop.f32.mrf.mxu0
        %1071 = vdwg.mxu0
        %1073 = vrot.lane.b32.xlu0 %v775, 96
        %v1074 = vpop.permute.xlu0 %1073
        %v1076 = vsel %vm780, %v775, 0
        %v1079 = vsel %vm780, %v1074, 0
        %1081 = vmatprep.subr.bf16.mxu0 0
        %1082 = vmatpush1.bf16.xpose.msra.mxu0 0
        %1083 = vmatprep.subr.bf16.mxu0 0
        %1084 = vmatpush1.bf16.xpose.msra.mxu0 0
        %1085 = vmatprep.subr.bf16.mxu0 0
        %1086 = vmatpush1.bf16.xpose.msra.mxu0 0
        %1087 = vmatprep.subr.bf16.mxu0 0
        %1088 = vmatpush1.bf16.xpose.msra.mxu0 0
        %1089 = vmatprep.subr.bf16.mxu0 0
        %1090 = vmatpush1.bf16.xpose.msra.mxu0 0
        %1091 = vmatprep.subr.bf16.mxu0 0
        %1092 = vmatpush1.bf16.xpose.msra.mxu0 0
        %1093 = vmatprep.subr.bf16.mxu0 0
        %1094 = vmatpush1.bf16.xpose.msra.mxu0 0
        %1095 = vmatprep.subr.bf16.mxu0 0
        %1096 = vmatpush1.bf16.xpose.msra.mxu0 %v1079
        %1097 = vmatprep.subr.bf16.mxu0 0
        %1098 = vmatpush2.bf16.xpose.msra.mxu0 0
        %1099 = vmatprep.subr.bf16.mxu0 0
        %1100 = vmatpush2.bf16.xpose.msra.mxu0 0
        %1101 = vmatprep.subr.bf16.mxu0 0
        %1102 = vmatpush2.bf16.xpose.msra.mxu0 0
        %1103 = vmatprep.subr.bf16.mxu0 0
        %1104 = vmatpush2.bf16.xpose.msra.mxu0 0
        %1105 = vmatprep.subr.bf16.mxu0 0
        %1106 = vmatpush2.bf16.xpose.msra.mxu0 0
        %1107 = vmatprep.subr.bf16.mxu0 0
        %1108 = vmatpush2.bf16.xpose.msra.mxu0 0
        %1109 = vmatprep.subr.bf16.mxu0 0
        %1110 = vmatpush2.bf16.xpose.msra.mxu0 0
        %1111 = vmatprep.subr.bf16.mxu0 0
        %1112 = vmatpush2.bf16.xpose.msra.mxu0 0
        %1113 = vmatprep.mubr.bf16.mxu0 0
        %1114 = vmatmul.mubr.bf16.gmra.mxu0 %v1076
        %v1115 = vpop.f32.mrf.mxu0
        %v1116 = vadd.f32 0.0, %v1115
        %v1117 = vpop.f32.mrf.mxu0
        %v1118 = vpop.f32.mrf.mxu0
        %v1119 = vpop.f32.mrf.mxu0
        %1120 = vdwg.mxu0
        %1122 = vrot.lane.b32.xlu0 %v776, 96
        %v1123 = vpop.permute.xlu0 %1122
        %v1125 = vsel %vm780, %v776, 0
        %v1128 = vsel %vm780, %v1123, 0
        %1130 = vmatprep.subr.bf16.mxu0 0
        %1131 = vmatpush1.bf16.xpose.msra.mxu0 0
        %1132 = vmatprep.subr.bf16.mxu0 0
        %1133 = vmatpush1.bf16.xpose.msra.mxu0 0
        %1134 = vmatprep.subr.bf16.mxu0 0
        %1135 = vmatpush1.bf16.xpose.msra.mxu0 0
        %1136 = vmatprep.subr.bf16.mxu0 0
        %1137 = vmatpush1.bf16.xpose.msra.mxu0 0
        %1138 = vmatprep.subr.bf16.mxu0 0
        %1139 = vmatpush1.bf16.xpose.msra.mxu0 0
        %1140 = vmatprep.subr.bf16.mxu0 0
        %1141 = vmatpush1.bf16.xpose.msra.mxu0 0
        %1142 = vmatprep.subr.bf16.mxu0 0
        %1143 = vmatpush1.bf16.xpose.msra.mxu0 0
        %1144 = vmatprep.subr.bf16.mxu0 0
        %1145 = vmatpush1.bf16.xpose.msra.mxu0 %v1128
        %1146 = vmatprep.subr.bf16.mxu0 0
        %1147 = vmatpush2.bf16.xpose.msra.mxu0 0
        %1148 = vmatprep.subr.bf16.mxu0 0
        %1149 = vmatpush2.bf16.xpose.msra.mxu0 0
        %1150 = vmatprep.subr.bf16.mxu0 0
        %1151 = vmatpush2.bf16.xpose.msra.mxu0 0
        %1152 = vmatprep.subr.bf16.mxu0 0
        %1153 = vmatpush2.bf16.xpose.msra.mxu0 0
        %1154 = vmatprep.subr.bf16.mxu0 0
        %1155 = vmatpush2.bf16.xpose.msra.mxu0 0
        %1156 = vmatprep.subr.bf16.mxu0 0
        %1157 = vmatpush2.bf16.xpose.msra.mxu0 0
        %1158 = vmatprep.subr.bf16.mxu0 0
        %1159 = vmatpush2.bf16.xpose.msra.mxu0 0
        %1160 = vmatprep.subr.bf16.mxu0 0
        %1161 = vmatpush2.bf16.xpose.msra.mxu0 0
        %1162 = vmatprep.mubr.bf16.mxu0 0
        %1163 = vmatmul.mubr.bf16.gmra.mxu0 %v1125
        %v1164 = vpop.f32.mrf.mxu0
        %v1165 = vadd.f32 0.0, %v1164
        %v1166 = vpop.f32.mrf.mxu0
        %v1167 = vpop.f32.mrf.mxu0
        %v1168 = vpop.f32.mrf.mxu0
        %1169 = vdwg.mxu0
        %v1170 = vmul.f32 %v822, 0.35355338
        %v1171 = vmul.f32 %v871, 0.35355338
        %v1172 = vmul.f32 %v920, 0.35355338
        %v1173 = vmul.f32 %v969, 0.35355338
        %v1174 = vmul.f32 %v1018, 0.35355338
        %v1175 = vmul.f32 %v1067, 0.35355338
        %v1176 = vmul.f32 %v1116, 0.35355338
        %v1177 = vmul.f32 %v1165, 0.35355338
        %v1178 = vld [vmem:[#allocation6] sm:$0x1]
        %v1179 = vld [vmem:[#allocation6 + $0x1] sm:$0x1]
        %v1182 = vlaneseq
        %v1183 = vshrl.u32 %v1182, 7
        %v1184 = vsub.s32 0, %v1183
        %v1185 = vrot.slane %v1178, %v1184
        %v1186 = vlaneseq
        %v1187 = vshrl.u32 %v1186, 7
        %v1188 = vsub.s32 0, %v1187
        %v1189 = vrot.slane %v1179, %v1188
        %v1192 = vadd.f32 %v1170, %v1185
        %v1193 = vadd.f32 %v1171, %v1185
        %v1194 = vadd.f32 %v1172, %v1185
        %v1195 = vadd.f32 %v1173, %v1185
        %v1196 = vadd.f32 %v1174, %v1189
        %v1197 = vadd.f32 %v1175, %v1189
        %v1198 = vadd.f32 %v1176, %v1189
        %v1199 = vadd.f32 %v1177, %v1189
        %v1200 = vsel %vm780, %v1192, -inf
        %1201 = vmax.xlane.f32.xlu0 %v1200
        %v1202 = vpop.xlane.xlu0 %1201
        %v1203 = vsel %vm780, %v1193, -inf
        %1204 = vmax.xlane.f32.xlu0 %v1203
        %v1205 = vpop.xlane.xlu0 %1204
        %v1206 = vsel %vm780, %v1194, -inf
        %1207 = vmax.xlane.f32.xlu0 %v1206
        %v1208 = vpop.xlane.xlu0 %1207
        %v1209 = vsel %vm780, %v1195, -inf
        %1210 = vmax.xlane.f32.xlu0 %v1209
        %v1211 = vpop.xlane.xlu0 %1210
        %v1212 = vsel %vm780, %v1196, -inf
        %1213 = vmax.xlane.f32.xlu0 %v1212
        %v1214 = vpop.xlane.xlu0 %1213
        %v1215 = vsel %vm780, %v1197, -inf
        %1216 = vmax.xlane.f32.xlu0 %v1215
        %v1217 = vpop.xlane.xlu0 %1216
        %v1218 = vsel %vm780, %v1198, -inf
        %1219 = vmax.xlane.f32.xlu0 %v1218
        %v1220 = vpop.xlane.xlu0 %1219
        %v1221 = vsel %vm780, %v1199, -inf
        %1222 = vmax.xlane.f32.xlu0 %v1221
        %v1223 = vpop.xlane.xlu0 %1222
        %v1224 = vsub.f32 %v1192, %v1202
        %v1225 = vsub.f32 %v1193, %v1205
        %v1226 = vsub.f32 %v1194, %v1208
        %v1227 = vsub.f32 %v1195, %v1211
        %v1228 = vsub.f32 %v1196, %v1214
        %v1229 = vsub.f32 %v1197, %v1217
        %v1230 = vsub.f32 %v1198, %v1220
        %v1231 = vsub.f32 %v1199, %v1223
        %v1232 = vmul.f32 %v1224, 1.442695
        %v1233 = vpow.pop %v1232
        %v1234 = vmul.f32 %v1225, 1.442695
        %v1235 = vpow.pop %v1234
        %v1236 = vmul.f32 %v1226, 1.442695
        %v1237 = vpow.pop %v1236
        %v1238 = vmul.f32 %v1227, 1.442695
        %v1239 = vpow.pop %v1238
        %v1240 = vmul.f32 %v1228, 1.442695
        %v1241 = vpow.pop %v1240
        %v1242 = vmul.f32 %v1229, 1.442695
        %v1243 = vpow.pop %v1242
        %v1244 = vmul.f32 %v1230, 1.442695
        %v1245 = vpow.pop %v1244
        %v1246 = vmul.f32 %v1231, 1.442695
        %v1247 = vpow.pop %v1246
        %v1248 = vsel %vm780, %v1233, 0.0
        %1249 = vadd.xlane.f32.xlu0 %v1248
        %v1250 = vpop.xlane.xlu0 %1249
        %v1251 = vsel %vm780, %v1235, 0.0
        %1252 = vadd.xlane.f32.xlu0 %v1251
        %v1253 = vpop.xlane.xlu0 %1252
        %v1254 = vsel %vm780, %v1237, 0.0
        %1255 = vadd.xlane.f32.xlu0 %v1254
        %v1256 = vpop.xlane.xlu0 %1255
        %v1257 = vsel %vm780, %v1239, 0.0
        %1258 = vadd.xlane.f32.xlu0 %v1257
        %v1259 = vpop.xlane.xlu0 %1258
        %v1260 = vsel %vm780, %v1241, 0.0
        %1261 = vadd.xlane.f32.xlu0 %v1260
        %v1262 = vpop.xlane.xlu0 %1261
        %v1263 = vsel %vm780, %v1243, 0.0
        %1264 = vadd.xlane.f32.xlu0 %v1263
        %v1265 = vpop.xlane.xlu0 %1264
        %v1266 = vsel %vm780, %v1245, 0.0
        %1267 = vadd.xlane.f32.xlu0 %v1266
        %v1268 = vpop.xlane.xlu0 %1267
        %v1269 = vsel %vm780, %v1247, 0.0
        %1270 = vadd.xlane.f32.xlu0 %v1269
        %v1271 = vpop.xlane.xlu0 %1270
        %v1272 = vrcp.pop %v1250
        %v1273 = vrcp.pop %v1253
        %v1274 = vrcp.pop %v1256
        %v1275 = vrcp.pop %v1259
        %v1276 = vrcp.pop %v1262
        %v1277 = vrcp.pop %v1265
        %v1278 = vrcp.pop %v1268
        %v1279 = vrcp.pop %v1271
        %v1280 = vmul.f32 %v1233, %v1272
        %v1281 = vmul.f32 %v1235, %v1273
        %v1282 = vmul.f32 %v1237, %v1274
        %v1283 = vmul.f32 %v1239, %v1275
        %v1284 = vmul.f32 %v1241, %v1276
        %v1285 = vmul.f32 %v1243, %v1277
        %v1286 = vmul.f32 %v1245, %v1278
        %v1287 = vmul.f32 %v1247, %v1279
        %v1288 = vpack.c.bf16 %v1280, %v1280
        %v1289 = vpack.c.bf16 %v1281, %v1281
        %v1290 = vpack.c.bf16 %v1282, %v1282
        %v1291 = vpack.c.bf16 %v1283, %v1283
        %v1292 = vpack.c.bf16 %v1284, %v1284
        %v1293 = vpack.c.bf16 %v1285, %v1285
        %v1294 = vpack.c.bf16 %v1286, %v1286
        %v1295 = vpack.c.bf16 %v1287, %v1287
        %1296 = vrot.lane.b32.xlu0 %v769, 64
        %v1297 = vpop.permute.xlu0 %1296
        %v1299 = vsel %vm780, %v1288, 0
        %vm1301 = vcmask 1043456
        %v1303 = vsel %vm1301, %v1297, 0
        %1305 = vmatprep.subr.bf16.mxu0 0
        %1306 = vmatpush1.bf16.msra.mxu0 0
        %1307 = vmatprep.subr.bf16.mxu0 0
        %1308 = vmatpush1.bf16.msra.mxu0 0
        %1309 = vmatprep.subr.bf16.mxu0 0
        %1310 = vmatpush1.bf16.msra.mxu0 0
        %1311 = vmatprep.subr.bf16.mxu0 0
        %1312 = vmatpush1.bf16.msra.mxu0 0
        %1313 = vmatprep.subr.bf16.mxu0 0
        %1314 = vmatpush1.bf16.msra.mxu0 0
        %1315 = vmatprep.subr.bf16.mxu0 0
        %1316 = vmatpush1.bf16.msra.mxu0 0
        %1317 = vmatprep.subr.bf16.mxu0 0
        %1318 = vmatpush1.bf16.msra.mxu0 0
        %1319 = vmatprep.subr.bf16.mxu0 0
        %1320 = vmatpush1.bf16.msra.mxu0 %v1303
        %1321 = vmatprep.subr.bf16.mxu0 0
        %1322 = vmatpush2.bf16.msra.mxu0 0
        %1323 = vmatprep.subr.bf16.mxu0 0
        %1324 = vmatpush2.bf16.msra.mxu0 0
        %1325 = vmatprep.subr.bf16.mxu0 0
        %1326 = vmatpush2.bf16.msra.mxu0 0
        %1327 = vmatprep.subr.bf16.mxu0 0
        %1328 = vmatpush2.bf16.msra.mxu0 0
        %1329 = vmatprep.subr.bf16.mxu0 0
        %1330 = vmatpush2.bf16.msra.mxu0 0
        %1331 = vmatprep.subr.bf16.mxu0 0
        %1332 = vmatpush2.bf16.msra.mxu0 0
        %1333 = vmatprep.subr.bf16.mxu0 0
        %1334 = vmatpush2.bf16.msra.mxu0 0
        %1335 = vmatprep.subr.bf16.mxu0 0
        %1336 = vmatpush2.bf16.msra.mxu0 0
        %1337 = vmatprep.mubr.bf16.mxu0 0
        %1338 = vmatmul.mubr.bf16.gmra.mxu0 %v1299
        %v1339 = vpop.f32.mrf.mxu0
        %v1340 = vadd.f32 0.0, %v1339
        %v1341 = vpop.f32.mrf.mxu0
        %v1342 = vpop.f32.mrf.mxu0
        %v1343 = vpop.f32.mrf.mxu0
        %1344 = vdwg.mxu0
        %1345 = vrot.lane.b32.xlu0 %v770, 64
        %v1346 = vpop.permute.xlu0 %1345
        %v1348 = vsel %vm780, %v1289, 0
        %v1351 = vsel %vm1301, %v1346, 0
        %1353 = vmatprep.subr.bf16.mxu0 0
        %1354 = vmatpush1.bf16.msra.mxu0 0
        %1355 = vmatprep.subr.bf16.mxu0 0
        %1356 = vmatpush1.bf16.msra.mxu0 0
        %1357 = vmatprep.subr.bf16.mxu0 0
        %1358 = vmatpush1.bf16.msra.mxu0 0
        %1359 = vmatprep.subr.bf16.mxu0 0
        %1360 = vmatpush1.bf16.msra.mxu0 0
        %1361 = vmatprep.subr.bf16.mxu0 0
        %1362 = vmatpush1.bf16.msra.mxu0 0
        %1363 = vmatprep.subr.bf16.mxu0 0
        %1364 = vmatpush1.bf16.msra.mxu0 0
        %1365 = vmatprep.subr.bf16.mxu0 0
        %1366 = vmatpush1.bf16.msra.mxu0 0
        %1367 = vmatprep.subr.bf16.mxu0 0
        %1368 = vmatpush1.bf16.msra.mxu0 %v1351
        %1369 = vmatprep.subr.bf16.mxu0 0
        %1370 = vmatpush2.bf16.msra.mxu0 0
        %1371 = vmatprep.subr.bf16.mxu0 0
        %1372 = vmatpush2.bf16.msra.mxu0 0
        %1373 = vmatprep.subr.bf16.mxu0 0
        %1374 = vmatpush2.bf16.msra.mxu0 0
        %1375 = vmatprep.subr.bf16.mxu0 0
        %1376 = vmatpush2.bf16.msra.mxu0 0
        %1377 = vmatprep.subr.bf16.mxu0 0
        %1378 = vmatpush2.bf16.msra.mxu0 0
        %1379 = vmatprep.subr.bf16.mxu0 0
        %1380 = vmatpush2.bf16.msra.mxu0 0
        %1381 = vmatprep.subr.bf16.mxu0 0
        %1382 = vmatpush2.bf16.msra.mxu0 0
        %1383 = vmatprep.subr.bf16.mxu0 0
        %1384 = vmatpush2.bf16.msra.mxu0 0
        %1385 = vmatprep.mubr.bf16.mxu0 0
        %1386 = vmatmul.mubr.bf16.gmra.mxu0 %v1348
        %v1387 = vpop.f32.mrf.mxu0
        %v1388 = vadd.f32 0.0, %v1387
        %v1389 = vpop.f32.mrf.mxu0
        %v1390 = vpop.f32.mrf.mxu0
        %v1391 = vpop.f32.mrf.mxu0
        %1392 = vdwg.mxu0
        %1393 = vrot.lane.b32.xlu0 %v771, 64
        %v1394 = vpop.permute.xlu0 %1393
        %v1396 = vsel %vm780, %v1290, 0
        %v1399 = vsel %vm1301, %v1394, 0
        %1401 = vmatprep.subr.bf16.mxu0 0
        %1402 = vmatpush1.bf16.msra.mxu0 0
        %1403 = vmatprep.subr.bf16.mxu0 0
        %1404 = vmatpush1.bf16.msra.mxu0 0
        %1405 = vmatprep.subr.bf16.mxu0 0
        %1406 = vmatpush1.bf16.msra.mxu0 0
        %1407 = vmatprep.subr.bf16.mxu0 0
        %1408 = vmatpush1.bf16.msra.mxu0 0
        %1409 = vmatprep.subr.bf16.mxu0 0
        %1410 = vmatpush1.bf16.msra.mxu0 0
        %1411 = vmatprep.subr.bf16.mxu0 0
        %1412 = vmatpush1.bf16.msra.mxu0 0
        %1413 = vmatprep.subr.bf16.mxu0 0
        %1414 = vmatpush1.bf16.msra.mxu0 0
        %1415 = vmatprep.subr.bf16.mxu0 0
        %1416 = vmatpush1.bf16.msra.mxu0 %v1399
        %1417 = vmatprep.subr.bf16.mxu0 0
        %1418 = vmatpush2.bf16.msra.mxu0 0
        %1419 = vmatprep.subr.bf16.mxu0 0
        %1420 = vmatpush2.bf16.msra.mxu0 0
        %1421 = vmatprep.subr.bf16.mxu0 0
        %1422 = vmatpush2.bf16.msra.mxu0 0
        %1423 = vmatprep.subr.bf16.mxu0 0
        %1424 = vmatpush2.bf16.msra.mxu0 0
        %1425 = vmatprep.subr.bf16.mxu0 0
        %1426 = vmatpush2.bf16.msra.mxu0 0
        %1427 = vmatprep.subr.bf16.mxu0 0
        %1428 = vmatpush2.bf16.msra.mxu0 0
        %1429 = vmatprep.subr.bf16.mxu0 0
        %1430 = vmatpush2.bf16.msra.mxu0 0
        %1431 = vmatprep.subr.bf16.mxu0 0
        %1432 = vmatpush2.bf16.msra.mxu0 0
        %1433 = vmatprep.mubr.bf16.mxu0 0
        %1434 = vmatmul.mubr.bf16.gmra.mxu0 %v1396
        %v1435 = vpop.f32.mrf.mxu0
        %v1436 = vadd.f32 0.0, %v1435
        %v1437 = vpop.f32.mrf.mxu0
        %v1438 = vpop.f32.mrf.mxu0
        %v1439 = vpop.f32.mrf.mxu0
        %1440 = vdwg.mxu0
        %1441 = vrot.lane.b32.xlu0 %v772, 64
        %v1442 = vpop.permute.xlu0 %1441
        %v1444 = vsel %vm780, %v1291, 0
        %v1447 = vsel %vm1301, %v1442, 0
        %1449 = vmatprep.subr.bf16.mxu0 0
        %1450 = vmatpush1.bf16.msra.mxu0 0
        %1451 = vmatprep.subr.bf16.mxu0 0
        %1452 = vmatpush1.bf16.msra.mxu0 0
        %1453 = vmatprep.subr.bf16.mxu0 0
        %1454 = vmatpush1.bf16.msra.mxu0 0
        %1455 = vmatprep.subr.bf16.mxu0 0
        %1456 = vmatpush1.bf16.msra.mxu0 0
        %1457 = vmatprep.subr.bf16.mxu0 0
        %1458 = vmatpush1.bf16.msra.mxu0 0
        %1459 = vmatprep.subr.bf16.mxu0 0
        %1460 = vmatpush1.bf16.msra.mxu0 0
        %1461 = vmatprep.subr.bf16.mxu0 0
        %1462 = vmatpush1.bf16.msra.mxu0 0
        %1463 = vmatprep.subr.bf16.mxu0 0
        %1464 = vmatpush1.bf16.msra.mxu0 %v1447
        %1465 = vmatprep.subr.bf16.mxu0 0
        %1466 = vmatpush2.bf16.msra.mxu0 0
        %1467 = vmatprep.subr.bf16.mxu0 0
        %1468 = vmatpush2.bf16.msra.mxu0 0
        %1469 = vmatprep.subr.bf16.mxu0 0
        %1470 = vmatpush2.bf16.msra.mxu0 0
        %1471 = vmatprep.subr.bf16.mxu0 0
        %1472 = vmatpush2.bf16.msra.mxu0 0
        %1473 = vmatprep.subr.bf16.mxu0 0
        %1474 = vmatpush2.bf16.msra.mxu0 0
        %1475 = vmatprep.subr.bf16.mxu0 0
        %1476 = vmatpush2.bf16.msra.mxu0 0
        %1477 = vmatprep.subr.bf16.mxu0 0
        %1478 = vmatpush2.bf16.msra.mxu0 0
        %1479 = vmatprep.subr.bf16.mxu0 0
        %1480 = vmatpush2.bf16.msra.mxu0 0
        %1481 = vmatprep.mubr.bf16.mxu0 0
        %1482 = vmatmul.mubr.bf16.gmra.mxu0 %v1444
        %v1483 = vpop.f32.mrf.mxu0
        %v1484 = vadd.f32 0.0, %v1483
        %v1485 = vpop.f32.mrf.mxu0
        %v1486 = vpop.f32.mrf.mxu0
        %v1487 = vpop.f32.mrf.mxu0
        %1488 = vdwg.mxu0
        %1489 = vrot.lane.b32.xlu0 %v773, 64
        %v1490 = vpop.permute.xlu0 %1489
        %v1492 = vsel %vm780, %v1292, 0
        %v1495 = vsel %vm1301, %v1490, 0
        %1497 = vmatprep.subr.bf16.mxu0 0
        %1498 = vmatpush1.bf16.msra.mxu0 0
        %1499 = vmatprep.subr.bf16.mxu0 0
        %1500 = vmatpush1.bf16.msra.mxu0 0
        %1501 = vmatprep.subr.bf16.mxu0 0
        %1502 = vmatpush1.bf16.msra.mxu0 0
        %1503 = vmatprep.subr.bf16.mxu0 0
        %1504 = vmatpush1.bf16.msra.mxu0 0
        %1505 = vmatprep.subr.bf16.mxu0 0
        %1506 = vmatpush1.bf16.msra.mxu0 0
        %1507 = vmatprep.subr.bf16.mxu0 0
        %1508 = vmatpush1.bf16.msra.mxu0 0
        %1509 = vmatprep.subr.bf16.mxu0 0
        %1510 = vmatpush1.bf16.msra.mxu0 0
        %1511 = vmatprep.subr.bf16.mxu0 0
        %1512 = vmatpush1.bf16.msra.mxu0 %v1495
        %1513 = vmatprep.subr.bf16.mxu0 0
        %1514 = vmatpush2.bf16.msra.mxu0 0
        %1515 = vmatprep.subr.bf16.mxu0 0
        %1516 = vmatpush2.bf16.msra.mxu0 0
        %1517 = vmatprep.subr.bf16.mxu0 0
        %1518 = vmatpush2.bf16.msra.mxu0 0
        %1519 = vmatprep.subr.bf16.mxu0 0
        %1520 = vmatpush2.bf16.msra.mxu0 0
        %1521 = vmatprep.subr.bf16.mxu0 0
        %1522 = vmatpush2.bf16.msra.mxu0 0
        %1523 = vmatprep.subr.bf16.mxu0 0
        %1524 = vmatpush2.bf16.msra.mxu0 0
        %1525 = vmatprep.subr.bf16.mxu0 0
        %1526 = vmatpush2.bf16.msra.mxu0 0
        %1527 = vmatprep.subr.bf16.mxu0 0
        %1528 = vmatpush2.bf16.msra.mxu0 0
        %1529 = vmatprep.mubr.bf16.mxu0 0
        %1530 = vmatmul.mubr.bf16.gmra.mxu0 %v1492
        %v1531 = vpop.f32.mrf.mxu0
        %v1532 = vadd.f32 0.0, %v1531
        %v1533 = vpop.f32.mrf.mxu0
        %v1534 = vpop.f32.mrf.mxu0
        %v1535 = vpop.f32.mrf.mxu0
        %1536 = vdwg.mxu0
        %1537 = vrot.lane.b32.xlu0 %v774, 64
        %v1538 = vpop.permute.xlu0 %1537
        %v1540 = vsel %vm780, %v1293, 0
        %v1543 = vsel %vm1301, %v1538, 0
        %1545 = vmatprep.subr.bf16.mxu0 0
        %1546 = vmatpush1.bf16.msra.mxu0 0
        %1547 = vmatprep.subr.bf16.mxu0 0
        %1548 = vmatpush1.bf16.msra.mxu0 0
        %1549 = vmatprep.subr.bf16.mxu0 0
        %1550 = vmatpush1.bf16.msra.mxu0 0
        %1551 = vmatprep.subr.bf16.mxu0 0
        %1552 = vmatpush1.bf16.msra.mxu0 0
        %1553 = vmatprep.subr.bf16.mxu0 0
        %1554 = vmatpush1.bf16.msra.mxu0 0
        %1555 = vmatprep.subr.bf16.mxu0 0
        %1556 = vmatpush1.bf16.msra.mxu0 0
        %1557 = vmatprep.subr.bf16.mxu0 0
        %1558 = vmatpush1.bf16.msra.mxu0 0
        %1559 = vmatprep.subr.bf16.mxu0 0
        %1560 = vmatpush1.bf16.msra.mxu0 %v1543
        %1561 = vmatprep.subr.bf16.mxu0 0
        %1562 = vmatpush2.bf16.msra.mxu0 0
        %1563 = vmatprep.subr.bf16.mxu0 0
        %1564 = vmatpush2.bf16.msra.mxu0 0
        %1565 = vmatprep.subr.bf16.mxu0 0
        %1566 = vmatpush2.bf16.msra.mxu0 0
        %1567 = vmatprep.subr.bf16.mxu0 0
        %1568 = vmatpush2.bf16.msra.mxu0 0
        %1569 = vmatprep.subr.bf16.mxu0 0
        %1570 = vmatpush2.bf16.msra.mxu0 0
        %1571 = vmatprep.subr.bf16.mxu0 0
        %1572 = vmatpush2.bf16.msra.mxu0 0
        %1573 = vmatprep.subr.bf16.mxu0 0
        %1574 = vmatpush2.bf16.msra.mxu0 0
        %1575 = vmatprep.subr.bf16.mxu0 0
        %1576 = vmatpush2.bf16.msra.mxu0 0
        %1577 = vmatprep.mubr.bf16.mxu0 0
        %1578 = vmatmul.mubr.bf16.gmra.mxu0 %v1540
        %v1579 = vpop.f32.mrf.mxu0
        %v1580 = vadd.f32 0.0, %v1579
        %v1581 = vpop.f32.mrf.mxu0
        %v1582 = vpop.f32.mrf.mxu0
        %v1583 = vpop.f32.mrf.mxu0
        %1584 = vdwg.mxu0
        %1585 = vrot.lane.b32.xlu0 %v775, 64
        %v1586 = vpop.permute.xlu0 %1585
        %v1588 = vsel %vm780, %v1294, 0
        %v1591 = vsel %vm1301, %v1586, 0
        %1593 = vmatprep.subr.bf16.mxu0 0
        %1594 = vmatpush1.bf16.msra.mxu0 0
        %1595 = vmatprep.subr.bf16.mxu0 0
        %1596 = vmatpush1.bf16.msra.mxu0 0
        %1597 = vmatprep.subr.bf16.mxu0 0
        %1598 = vmatpush1.bf16.msra.mxu0 0
        %1599 = vmatprep.subr.bf16.mxu0 0
        %1600 = vmatpush1.bf16.msra.mxu0 0
        %1601 = vmatprep.subr.bf16.mxu0 0
        %1602 = vmatpush1.bf16.msra.mxu0 0
        %1603 = vmatprep.subr.bf16.mxu0 0
        %1604 = vmatpush1.bf16.msra.mxu0 0
        %1605 = vmatprep.subr.bf16.mxu0 0
        %1606 = vmatpush1.bf16.msra.mxu0 0
        %1607 = vmatprep.subr.bf16.mxu0 0
        %1608 = vmatpush1.bf16.msra.mxu0 %v1591
        %1609 = vmatprep.subr.bf16.mxu0 0
        %1610 = vmatpush2.bf16.msra.mxu0 0
        %1611 = vmatprep.subr.bf16.mxu0 0
        %1612 = vmatpush2.bf16.msra.mxu0 0
        %1613 = vmatprep.subr.bf16.mxu0 0
        %1614 = vmatpush2.bf16.msra.mxu0 0
        %1615 = vmatprep.subr.bf16.mxu0 0
        %1616 = vmatpush2.bf16.msra.mxu0 0
        %1617 = vmatprep.subr.bf16.mxu0 0
        %1618 = vmatpush2.bf16.msra.mxu0 0
        %1619 = vmatprep.subr.bf16.mxu0 0
        %1620 = vmatpush2.bf16.msra.mxu0 0
        %1621 = vmatprep.subr.bf16.mxu0 0
        %1622 = vmatpush2.bf16.msra.mxu0 0
        %1623 = vmatprep.subr.bf16.mxu0 0
        %1624 = vmatpush2.bf16.msra.mxu0 0
        %1625 = vmatprep.mubr.bf16.mxu0 0
        %1626 = vmatmul.mubr.bf16.gmra.mxu0 %v1588
        %v1627 = vpop.f32.mrf.mxu0
        %v1628 = vadd.f32 0.0, %v1627
        %v1629 = vpop.f32.mrf.mxu0
        %v1630 = vpop.f32.mrf.mxu0
        %v1631 = vpop.f32.mrf.mxu0
        %1632 = vdwg.mxu0
        %1633 = vrot.lane.b32.xlu0 %v776, 64
        %v1634 = vpop.permute.xlu0 %1633
        %v1636 = vsel %vm780, %v1295, 0
        %v1639 = vsel %vm1301, %v1634, 0
        %1641 = vmatprep.subr.bf16.mxu0 0
        %1642 = vmatpush1.bf16.msra.mxu0 0
        %1643 = vmatprep.subr.bf16.mxu0 0
        %1644 = vmatpush1.bf16.msra.mxu0 0
        %1645 = vmatprep.subr.bf16.mxu0 0
        %1646 = vmatpush1.bf16.msra.mxu0 0
        %1647 = vmatprep.subr.bf16.mxu0 0
        %1648 = vmatpush1.bf16.msra.mxu0 0
        %1649 = vmatprep.subr.bf16.mxu0 0
        %1650 = vmatpush1.bf16.msra.mxu0 0
        %1651 = vmatprep.subr.bf16.mxu0 0
        %1652 = vmatpush1.bf16.msra.mxu0 0
        %1653 = vmatprep.subr.bf16.mxu0 0
        %1654 = vmatpush1.bf16.msra.mxu0 0
        %1655 = vmatprep.subr.bf16.mxu0 0
        %1656 = vmatpush1.bf16.msra.mxu0 %v1639
        %1657 = vmatprep.subr.bf16.mxu0 0
        %1658 = vmatpush2.bf16.msra.mxu0 0
        %1659 = vmatprep.subr.bf16.mxu0 0
        %1660 = vmatpush2.bf16.msra.mxu0 0
        %1661 = vmatprep.subr.bf16.mxu0 0
        %1662 = vmatpush2.bf16.msra.mxu0 0
        %1663 = vmatprep.subr.bf16.mxu0 0
        %1664 = vmatpush2.bf16.msra.mxu0 0
        %1665 = vmatprep.subr.bf16.mxu0 0
        %1666 = vmatpush2.bf16.msra.mxu0 0
        %1667 = vmatprep.subr.bf16.mxu0 0
        %1668 = vmatpush2.bf16.msra.mxu0 0
        %1669 = vmatprep.subr.bf16.mxu0 0
        %1670 = vmatpush2.bf16.msra.mxu0 0
        %1671 = vmatprep.subr.bf16.mxu0 0
        %1672 = vmatpush2.bf16.msra.mxu0 0
        %1673 = vmatprep.mubr.bf16.mxu0 0
        %1674 = vmatmul.mubr.bf16.gmra.mxu0 %v1636
        %v1675 = vpop.f32.mrf.mxu0
        %v1676 = vadd.f32 0.0, %v1675
        %v1677 = vpop.f32.mrf.mxu0
        %v1678 = vpop.f32.mrf.mxu0
        %v1679 = vpop.f32.mrf.mxu0
        %1680 = vdwg.mxu0
        %1683 = vrot.lane.b32.xlu0 %v1388, 8
        %v1684 = vpop.permute.xlu0 %1683
        %1685 = vrot.lane.b32.xlu0 %v1580, 8
        %v1686 = vpop.permute.xlu0 %1685
        %1691 = vrot.lane.b32.xlu0 %v1436, 16
        %v1692 = vpop.permute.xlu0 %1691
        %1693 = vrot.lane.b32.xlu0 %v1628, 16
        %v1694 = vpop.permute.xlu0 %1693
        %1699 = vrot.lane.b32.xlu0 %v1484, 24
        %v1700 = vpop.permute.xlu0 %1699
        %1701 = vrot.lane.b32.xlu0 %v1676, 24
        %v1702 = vpop.permute.xlu0 %1701
        %v1705 = vsel %vm780, %v1340, %v1684
        %v1706 = vsel %vm780, %v1532, %v1686
        %vm1707 = vcmask 130048
        %v1708 = vsel %vm1707, %v1705, %v1692
        %v1709 = vsel %vm1707, %v1706, %v1694
        %vm1710 = vcmask 195584
        %v1711 = vsel %vm1710, %v1708, %v1700
        %v1712 = vsel %vm1710, %v1709, %v1702
        %v1713 = vpack.c.bf16 %v1712, %v1711
        %v1714 = vld [vmem:[%s636] sm:$0xf]
        %v1715 = vld [vmem:[%s636 + $0x4] sm:$0xf]
        %v1716 = vld [vmem:[%s636 + $0x8] sm:$0xf]
        %v1717 = vld [vmem:[%s636 + $0xc] sm:$0xf]
        %v1718 = vld [vmem:[%s639] sm:$0x1]
        %v1720 = vlaneseq
        %v1721 = vshrl.u32 %v1720, 7
        %v1722 = vsub.s32 0, %v1721
        %v1723 = vrot.slane %v1718, %v1722
        %v1729 = vunpack.c.l.b16 %v1714
        %v1730 = vunpack.c.l.b16 %v1715
        %v1731 = vunpack.c.l.b16 %v1716
        %v1732 = vunpack.c.l.b16 %v1717
        %v1733 = vpack.c.b16 %v1730, %v1729
        %v1734 = vpack.c.b16 %v1732, %v1731
        %v1738 = vsel %vm704, %v1713, 0
        %1740 = vmatprep.subr.bf16.mxu0 0
        %1741 = vmatpush1.bf16.msra.mxu0 0
        %1742 = vmatprep.subr.bf16.mxu0 0
        %1743 = vmatpush1.bf16.msra.mxu0 0
        %1744 = vmatprep.subr.bf16.mxu0 0
        %1745 = vmatpush1.bf16.msra.mxu0 0
        %1746 = vmatprep.subr.bf16.mxu0 0
        %1747 = vmatpush1.bf16.msra.mxu0 0
        %1748 = vmatprep.subr.bf16.mxu0 0
        %1749 = vmatpush1.bf16.msra.mxu0 0
        %1750 = vmatprep.subr.bf16.mxu0 0
        %1751 = vmatpush1.bf16.msra.mxu0 0
        %1752 = vmatprep.subr.bf16.mxu0 0
        %1753 = vmatpush1.bf16.msra.mxu0 %v1734
        %1754 = vmatprep.subr.bf16.mxu0 0
        %1755 = vmatpush1.bf16.msra.mxu0 %v1733
        %1756 = vmatprep.subr.bf16.mxu0 0
        %1757 = vmatpush2.bf16.msra.mxu0 0
        %1758 = vmatprep.subr.bf16.mxu0 0
        %1759 = vmatpush2.bf16.msra.mxu0 0
        %1760 = vmatprep.subr.bf16.mxu0 0
        %1761 = vmatpush2.bf16.msra.mxu0 0
        %1762 = vmatprep.subr.bf16.mxu0 0
        %1763 = vmatpush2.bf16.msra.mxu0 0
        %1764 = vmatprep.subr.bf16.mxu0 0
        %1765 = vmatpush2.bf16.msra.mxu0 0
        %1766 = vmatprep.subr.bf16.mxu0 0
        %1767 = vmatpush2.bf16.msra.mxu0 0
        %1768 = vmatprep.subr.bf16.mxu0 0
        %1769 = vmatpush2.bf16.msra.mxu0 0
        %1770 = vmatprep.subr.bf16.mxu0 0
        %1771 = vmatpush2.bf16.msra.mxu0 0
        %1772 = vmatprep.mubr.bf16.mxu0 0
        %1773 = vmatmul.mubr.bf16.gmra.mxu0 %v1738
        %v1774 = vpop.f32.mrf.mxu0
        %v1775 = vadd.f32 %v1723, %v1774
        %v1776 = vpop.f32.mrf.mxu0
        %v1777 = vpop.f32.mrf.mxu0
        %v1778 = vadd.f32 %v1723, %v1777
        %v1779 = vpop.f32.mrf.mxu0
        %1780 = vdwg.mxu0
        %v1781 = vadd.f32 %v1775, %v678
        %v1782 = vadd.f32 %v1778, %v679
        %v1783 = vld [vmem:[%s642] sm:$0x1]
        %v1784 = vld [vmem:[%s645] sm:$0x1]
        %v1785 = vsel %vm704, %v1781, 0.0
        %1786 = vadd.xlane.f32.xlu0 %v1785
        %v1787 = vpop.xlane.xlu0 %1786
        %v1788 = vsel %vm704, %v1782, 0.0
        %1789 = vadd.xlane.f32.xlu0 %v1788
        %v1790 = vpop.xlane.xlu0 %1789
        %v1791 = vrcp.pop 32.0
        %v1792 = vmul.f32 %v1787, %v1791
        %v1793 = vmul.f32 %v1790, %v1791
        %v1794 = vsub.f32 %v1781, %v1792
        %v1795 = vsub.f32 %v1782, %v1793
        %v1796 = vmul.f32 %v1794, %v1794
        %v1797 = vmul.f32 %v1795, %v1795
        %v1798 = vsel %vm704, %v1796, 0.0
        %1799 = vadd.xlane.f32.xlu0 %v1798
        %v1800 = vpop.xlane.xlu0 %1799
        %v1801 = vsel %vm704, %v1797, 0.0
        %1802 = vadd.xlane.f32.xlu0 %v1801
        %v1803 = vpop.xlane.xlu0 %1802
        %v1804 = vmul.f32 %v1800, %v1791
        %v1805 = vmul.f32 %v1803, %v1791
        %v1806 = vadd.f32 %v1804, 1e-12
        %v1807 = vadd.f32 %v1805, 1e-12
        %v1808 = vrsqrt.pop %v1806
        %v1809 = vrsqrt.pop %v1807
        %v1810 = vmul.f32 %v1794, %v1808
        %v1811 = vmul.f32 %v1795, %v1809
        %v1813 = vlaneseq
        %v1814 = vshrl.u32 %v1813, 7
        %v1815 = vsub.s32 0, %v1814
        %v1816 = vrot.slane %v1783, %v1815
        %v1818 = vmul.f32 %v1816, %v1810
        %v1819 = vmul.f32 %v1816, %v1811
        %v1821 = vlaneseq
        %v1822 = vshrl.u32 %v1821, 7
        %v1823 = vsub.s32 0, %v1822
        %v1824 = vrot.slane %v1784, %v1823
        %v1826 = vadd.f32 %v1818, %v1824
        %v1827 = vadd.f32 %v1819, %v1824
        %v1828 = vpack.c.bf16 %v1827, %v1826
        %v1829 = vld [vmem:[%s650] sm:$0xf]
        %v1830 = vld [vmem:[%s650 + $0x4] sm:$0xf]
        %v1831 = vld [vmem:[%s650 + $0x8] sm:$0xf]
        %v1832 = vld [vmem:[%s650 + $0xc] sm:$0xf]
        %v1833 = vld [vmem:[%s653] sm:$0x1]
        %v1835 = vlaneseq
        %v1836 = vshrl.u32 %v1835, 7
        %v1837 = vsub.s32 0, %v1836
        %v1838 = vrot.slane %v1833, %v1837
        %v1844 = vunpack.c.l.b16 %v1829
        %v1845 = vunpack.c.l.b16 %v1830
        %v1846 = vunpack.c.l.b16 %v1831
        %v1847 = vunpack.c.l.b16 %v1832
        %v1848 = vpack.c.b16 %v1845, %v1844
        %v1849 = vpack.c.b16 %v1847, %v1846
        %v1853 = vsel %vm704, %v1828, 0
        %1855 = vmatprep.subr.bf16.mxu0 0
        %1856 = vmatpush1.bf16.msra.mxu0 0
        %1857 = vmatprep.subr.bf16.mxu0 0
        %1858 = vmatpush1.bf16.msra.mxu0 0
        %1859 = vmatprep.subr.bf16.mxu0 0
        %1860 = vmatpush1.bf16.msra.mxu0 0
        %1861 = vmatprep.subr.bf16.mxu0 0
        %1862 = vmatpush1.bf16.msra.mxu0 0
        %1863 = vmatprep.subr.bf16.mxu0 0
        %1864 = vmatpush1.bf16.msra.mxu0 0
        %1865 = vmatprep.subr.bf16.mxu0 0
        %1866 = vmatpush1.bf16.msra.mxu0 0
        %1867 = vmatprep.subr.bf16.mxu0 0
        %1868 = vmatpush1.bf16.msra.mxu0 %v1849
        %1869 = vmatprep.subr.bf16.mxu0 0
        %1870 = vmatpush1.bf16.msra.mxu0 %v1848
        %1871 = vmatprep.subr.bf16.mxu0 0
        %1872 = vmatpush2.bf16.msra.mxu0 0
        %1873 = vmatprep.subr.bf16.mxu0 0
        %1874 = vmatpush2.bf16.msra.mxu0 0
        %1875 = vmatprep.subr.bf16.mxu0 0
        %1876 = vmatpush2.bf16.msra.mxu0 0
        %1877 = vmatprep.subr.bf16.mxu0 0
        %1878 = vmatpush2.bf16.msra.mxu0 0
        %1879 = vmatprep.subr.bf16.mxu0 0
        %1880 = vmatpush2.bf16.msra.mxu0 0
        %1881 = vmatprep.subr.bf16.mxu0 0
        %1882 = vmatpush2.bf16.msra.mxu0 0
        %1883 = vmatprep.subr.bf16.mxu0 0
        %1884 = vmatpush2.bf16.msra.mxu0 0
        %1885 = vmatprep.subr.bf16.mxu0 0
        %1886 = vmatpush2.bf16.msra.mxu0 0
        %1887 = vmatprep.mubr.bf16.mxu0 0
        %1888 = vmatmul.mubr.bf16.gmra.mxu0 %v1853
        %v1889 = vpop.f32.mrf.mxu0
        %v1890 = vadd.f32 %v1838, %v1889
        %v1891 = vpop.f32.mrf.mxu0
        %v1892 = vpop.f32.mrf.mxu0
        %v1893 = vadd.f32 %v1838, %v1892
        %v1894 = vpop.f32.mrf.mxu0
        %1895 = vdwg.mxu0
        %v1896 = vmul.f32 %v1890, 0.5
        %v1897 = vmul.f32 %v1893, 0.5
        %v1898 = vrcp.pop 1.4142135
        %v1899 = vmul.f32 %v1890, %v1898
        %v1900 = vmul.f32 %v1893, %v1898
        %v1901 = verf.f32.pop %v1899
        %v1902 = verf.f32.pop %v1900
        %v1903 = vadd.f32 %v1901, 1.0
        %v1904 = vadd.f32 %v1902, 1.0
        %v1905 = vmul.f32 %v1896, %v1903
        %v1906 = vmul.f32 %v1897, %v1904
        %v1907 = vpack.c.bf16 %v1906, %v1905
        %v1908 = vld [vmem:[%s658] sm:$0xf]
        %v1909 = vld [vmem:[%s658 + $0x4] sm:$0xf]
        %v1910 = vld [vmem:[%s658 + $0x8] sm:$0xf]
        %v1911 = vld [vmem:[%s658 + $0xc] sm:$0xf]
        %v1912 = vld [vmem:[%s658 + $0x10] sm:$0xf]
        %v1913 = vld [vmem:[%s658 + $0x14] sm:$0xf]
        %v1914 = vld [vmem:[%s658 + $0x18] sm:$0xf]
        %v1915 = vld [vmem:[%s658 + $0x1c] sm:$0xf]
        %v1916 = vld [vmem:[%s661] sm:$0x1]
        %v1918 = vlaneseq
        %v1919 = vshrl.u32 %v1918, 7
        %v1920 = vsub.s32 0, %v1919
        %v1921 = vrot.slane %v1916, %v1920
        %v1931 = vunpack.c.l.b16 %v1908
        %v1932 = vunpack.c.l.b16 %v1909
        %v1933 = vunpack.c.l.b16 %v1910
        %v1934 = vunpack.c.l.b16 %v1911
        %v1935 = vunpack.c.l.b16 %v1912
        %v1936 = vunpack.c.l.b16 %v1913
        %v1937 = vunpack.c.l.b16 %v1914
        %v1938 = vunpack.c.l.b16 %v1915
        %v1939 = vpack.c.b16 %v1932, %v1931
        %v1940 = vpack.c.b16 %v1934, %v1933
        %v1941 = vpack.c.b16 %v1936, %v1935
        %v1942 = vpack.c.b16 %v1938, %v1937
        %vm1947 = vcmask 523264
        %v1949 = vsel %vm1947, %v1907, 0
        %1951 = vmatprep.subr.bf16.mxu0 0
        %1952 = vmatpush1.bf16.msra.mxu0 0
        %1953 = vmatprep.subr.bf16.mxu0 0
        %1954 = vmatpush1.bf16.msra.mxu0 0
        %1955 = vmatprep.subr.bf16.mxu0 0
        %1956 = vmatpush1.bf16.msra.mxu0 0
        %1957 = vmatprep.subr.bf16.mxu0 0
        %1958 = vmatpush1.bf16.msra.mxu0 0
        %1959 = vmatprep.subr.bf16.mxu0 0
        %1960 = vmatpush1.bf16.msra.mxu0 %v1942
        %1961 = vmatprep.subr.bf16.mxu0 0
        %1962 = vmatpush1.bf16.msra.mxu0 %v1941
        %1963 = vmatprep.subr.bf16.mxu0 0
        %1964 = vmatpush1.bf16.msra.mxu0 %v1940
        %1965 = vmatprep.subr.bf16.mxu0 0
        %1966 = vmatpush1.bf16.msra.mxu0 %v1939
        %1967 = vmatprep.subr.bf16.mxu0 0
        %1968 = vmatpush2.bf16.msra.mxu0 0
        %1969 = vmatprep.subr.bf16.mxu0 0
        %1970 = vmatpush2.bf16.msra.mxu0 0
        %1971 = vmatprep.subr.bf16.mxu0 0
        %1972 = vmatpush2.bf16.msra.mxu0 0
        %1973 = vmatprep.subr.bf16.mxu0 0
        %1974 = vmatpush2.bf16.msra.mxu0 0
        %1975 = vmatprep.subr.bf16.mxu0 0
        %1976 = vmatpush2.bf16.msra.mxu0 0
        %1977 = vmatprep.subr.bf16.mxu0 0
        %1978 = vmatpush2.bf16.msra.mxu0 0
        %1979 = vmatprep.subr.bf16.mxu0 0
        %1980 = vmatpush2.bf16.msra.mxu0 0
        %1981 = vmatprep.subr.bf16.mxu0 0
        %1982 = vmatpush2.bf16.msra.mxu0 0
        %1983 = vmatprep.mubr.bf16.mxu0 0
        %1984 = vmatmul.mubr.bf16.gmra.mxu0 %v1949
        %v1985 = vpop.f32.mrf.mxu0
        %v1986 = vadd.f32 %v1921, %v1985
        %v1987 = vpop.f32.mrf.mxu0
        %v1988 = vpop.f32.mrf.mxu0
        %v1989 = vadd.f32 %v1921, %v1988
        %v1990 = vpop.f32.mrf.mxu0
        %1991 = vdwg.mxu0
        %v1992 = vadd.f32 %v1986, %v1826
        %v1993 = vadd.f32 %v1989, %v1827
        %v1994 = vld [vmem:[%s664] sm:$0x1]
        %v1995 = vld [vmem:[%s667] sm:$0x1]
        %v1996 = vsel %vm704, %v1992, 0.0
        %1997 = vadd.xlane.f32.xlu0 %v1996
        %v1998 = vpop.xlane.xlu0 %1997
        %v1999 = vsel %vm704, %v1993, 0.0
        %2000 = vadd.xlane.f32.xlu0 %v1999
        %v2001 = vpop.xlane.xlu0 %2000
        %v2002 = vmul.f32 %v1998, %v1791
        %v2003 = vmul.f32 %v2001, %v1791
        %v2004 = vsub.f32 %v1992, %v2002
        %v2005 = vsub.f32 %v1993, %v2003
        %v2006 = vmul.f32 %v2004, %v2004
        %v2007 = vmul.f32 %v2005, %v2005
        %v2008 = vsel %vm704, %v2006, 0.0
        %2009 = vadd.xlane.f32.xlu0 %v2008
        %v2010 = vpop.xlane.xlu0 %2009
        %v2011 = vsel %vm704, %v2007, 0.0
        %2012 = vadd.xlane.f32.xlu0 %v2011
        %v2013 = vpop.xlane.xlu0 %2012
        %v2014 = vmul.f32 %v2010, %v1791
        %v2015 = vmul.f32 %v2013, %v1791
        %v2016 = vadd.f32 %v2014, 1e-12
        %v2017 = vadd.f32 %v2015, 1e-12
        %v2018 = vrsqrt.pop %v2016
        %v2019 = vrsqrt.pop %v2017
        %v2020 = vmul.f32 %v2004, %v2018
        %v2021 = vmul.f32 %v2005, %v2019
        %v2023 = vlaneseq
        %v2024 = vshrl.u32 %v2023, 7
        %v2025 = vsub.s32 0, %v2024
        %v2026 = vrot.slane %v1994, %v2025
        %v2028 = vmul.f32 %v2026, %v2020
        %v2029 = vmul.f32 %v2026, %v2021
        %v2031 = vlaneseq
        %v2032 = vshrl.u32 %v2031, 7
        %v2033 = vsub.s32 0, %v2032
        %v2034 = vrot.slane %v1995, %v2033
        %v2036 = vadd.f32 %v2028, %v2034
        %v2037 = vadd.f32 %v2029, %v2034
        %2038 = vst.msk [vmem:[#allocation2] sm:$0xff] %vm704, %v2036
        %2039 = vst.msk [vmem:[#allocation2 + $0x8] sm:$0xff] %vm704, %v2037
        %2040 = vst.msk [vmem:[%s623] sm:$0xff] %vm704, %v2036
        %2041 = vst.msk [vmem:[%s623 + $0x8] sm:$0xff] %vm704, %v2037
        %s2042 = sand.u32 %s392, 1
        %s2043 = scalar_lea.sflag [#allocation5], %s2042
        %s2044 = sand.u32 %s392, 1
        %s2045 = smul.addr %s2044, 16
        %s2046 = scalar_lea.vmem [#allocation8], %s2045
        // Predicated region
        $region89: #{tpu_custom_call.1} parent=75 // pred_check
          %p2047 = pneg %p402
        $region90: #{tpu_custom_call.1} parent=75 // pred_check_branch
          %2049 = sbr.rel (%p2047) target = $region92
        $region91: #{tpu_custom_call.1} parent=75 // pred_region
          %s2051 = ssub.s32 256, 256
          %2052 = vsyncadd %s2043, %s2051
          %s2053 = smul.addr %s30, 2
          %s2054 = smul.addr %s2053, 128
          %s2055 = scalar_lea.hbm %s14, %s2054
          %s2056 = sshll.u32 %s2046, 4
          %s2057 = int_to_ptr.vmem [resolvable:$true] %s2056
          %2062 = dma.vmem_to_hbm [thread:$0]  %s2057, 256, %s2055, %s2043, 128, 128, 8
        $region92: #{tpu_custom_call.1} parent=75 // pred_fallthru
          _
      $region76: #{tpu_custom_call.1} parent=5 // pred_fallthru
        _
      %p2063 = scmp.le.s32.totalorder 2, %s25
      // Predicated region
      $region93: #{tpu_custom_call.1} parent=5 // pred_check
        %p2064 = pneg %p2063
      $region94: #{tpu_custom_call.1} parent=5 // pred_check_branch
        %2066 = sbr.rel (%p2064) target = $region96
      $region95: #{tpu_custom_call.1} parent=5 // pred_region
        %s2067 = ssub.s32 %s25, 2
        // Predicated region
        $region97: #{tpu_custom_call.1} parent=95 // pred_check
          %p2068 = pneg %p408
        $region98: #{tpu_custom_call.1} parent=95 // pred_check_branch
          %2070 = sbr.rel (%p2068) target = $region100
        $region99: #{tpu_custom_call.1} parent=95 // pred_region
          %s2071 = sand.u32 %s393, 1
          %s2072 = scalar_lea.sflag [#allocation5], %s2071
          %s2073 = sand.u32 %s393, 1
          %s2074 = smul.addr %s2073, 16
          %s2075 = scalar_lea.vmem [#allocation8], %s2074
          %2076 = dma.done %s2072, 256
        $region100: #{tpu_custom_call.1} parent=95 // pred_fallthru
          _
      $region96: #{tpu_custom_call.1} parent=5 // pred_fallthru
        _
    $region6: #{tpu_custom_call.1} parent=1 // loop_footer
      %s29 = sadd.s32 1, %s25
    $region7: #{tpu_custom_call.1} parent=1 // loop_footer_branch
      %24 = sbr.rel target = $region3
    $region8: #{tpu_custom_call.1} parent=1 // loop_exit
      _
    %2077 = vsyncpa [#allocation4], 1
    %s2078 = scalar_lea.sflag [#allocation4], 1
    %2079 = vsyncpa %s2078, 1
    %2080 = vsyncpa [#allocation7], 1
    %2081 = vsyncpa [#allocation5], 1
    %s2082 = scalar_lea.sflag [#allocation5], 1
    %2083 = vsyncpa %s2082, 1

</llo_original>
